<compile_context>
chip_gen: v7x
topology: tpu7x:2x2x1
jax: 0.10.0
libtpu: 0.0.40
codegen_flags: <defaults>
</compile_context>

<pallas_src>
import functools

import jax
import jax.numpy as jnp
from jax import lax
from jax.experimental import pallas as pl
from jax.experimental.pallas import tpu as pltpu

N_FEATURES = 13
FEATURE_NAMES = ['Months', 'Prin', 'SchedPrin', 'Prepay Prin', 'Refund Prin',
                 'Default', 'Writedown', 'Recovery', 'Interest', 'Servicing Fee',
                 'Beginning Balance', 'Balance', 'CFL']


def _loan_kernel(loans_ref, scal_ref, lag_ref, series_ref, out_ref, *, T, TL, TLp):
    """One grid step: BL loans x 1 scenario, computed at TLp lanes, TL stored."""
    s = pl.program_id(0)
    BL = loans_ref.shape[0]

    def store(k, x):                      # store a feature as soon as it is final
        out_ref[k, 0] = x[:, :TL]

    # ---- per-loan parameters --------------------------------------------------
    lp = loans_ref[...]                                  # (BL, 3): wac, wam, pv
    wac, wam, pv = lp[:, 0:1], lp[:, 1:2], lp[:, 2:3]

    # ---- per-scenario scalars (SMEM) ------------------------------------------
    aggMDR = scal_ref[s, 0]
    compIntHC = scal_ref[s, 1]
    sfee = scal_ref[s, 2]
    lag = lag_ref[s, 0]                                  # int32 recovery lag

    # ---- per-scenario curves (VMEM, zero/'last'-padded to TLp lanes) -----------
    ser = series_ref[0]                                  # (8, TLp)
    smm, dq, mdr = ser[0:1], ser[1:2], ser[2:3]
    refund_smm, timing = ser[3:4], ser[4:5]
    p_surv, sev_eff = ser[5:6], ser[6:7]                 # hoisted cumprod / padded sev

    col_i = lax.broadcasted_iota(jnp.int32, (1, TLp), 1)
    col = col_i.astype(jnp.float32)

    # TODO(synk): reference emits int64 'Months'; kept float32 so all 13 features
    # share one dtype in the stacked output.
    store(0, jnp.broadcast_to(col + 1.0, (BL, TLp)))

    # ---- MXU helper matrices (hoisted, ~TLp^2 * 4 B each) ----------------------
    row2 = lax.broadcasted_iota(jnp.int32, (TLp, TLp), 0)
    col2 = lax.broadcasted_iota(jnp.int32, (TLp, TLp), 1)
    cum_mat = (row2 <= col2).astype(jnp.float32)          # x @ cum_mat == cumsum(x)
    lag_mat = ((col2 - row2) == lag).astype(jnp.float32)  # x @ lag_mat == shift by lag

    def mxu(x, m):   # MXU is otherwise idle; bf16x3 keeps ~f32 accuracy.
        return jnp.dot(x, m, preferred_element_type=jnp.float32,
                       precision=lax.Precision.HIGHEST)

    # ---- amortization schedule -------------------------------------------------
    rate = wac / 12.0
    log1pr = jnp.log(1.0 + rate)
    inv_denom = 1.0 / (1.0 - jnp.exp(-wam * log1pr))      # (BL, 1): no slab divides
    pv_over_denom = pv * inv_denom
    X = pv_over_denom * rate                              # annuity payment (= -npf.pmt)

    e0 = jnp.exp(-(wam - col) * log1pr)                   # one exp for both endpoints
    bal_prev = jnp.where(col <= wam, pv_over_denom * (1.0 - e0), 0.0)
    bal_next = jnp.where(col + 1.0 <= wam,
                         pv_over_denom * (1.0 - e0 * (1.0 + rate)), 0.0)

    principals = jnp.where(col < float(T), X - bal_prev * rate, 0.0)
    # Reference divides by a zero balance past WAM (-> inf/nan); emit 0 there.
    pos_bal = bal_prev > 0.0
    paydown = jnp.where(pos_bal, principals / jnp.where(pos_bal, bal_prev, 1.0), 0.0)

    # ---- survivorship (aggregate-MDR adjusted) ----------------------------------
    default_agg = (pv * aggMDR) * timing                  # (BL, TLp)
    dqPrin_agg = paydown * default_agg
    # NOTE: unguarded epsilon form matches the reference; it produces huge (finite)
    # values if a loan amortizes to zero while aggMDR*timing is still nonzero.
    scaled_def = default_agg / (bal_prev * p_surv + 1e-12)
    cum_scaled = mxu(scaled_def, cum_mat)
    sv = p_surv * (1.0 - cum_scaled)                              # survivorship[:, 1:]
    surv_prev = jnp.where(col_i >= 1, pltpu.roll(sv, 1, axis=1), 1.0)  # [:, :-1]

    b_bal = surv_prev * bal_prev                           # Beginning Balance
    store(10, b_bal)
    act_bal = sv * bal_next                                # Balance
    store(11, act_bal)

    # ---- principal / default waterfall (is_advance = False) --------------------
    dq_mdr = dq + mdr
    sp = surv_prev * principals
    dqPrin = sp * dq_mdr + dqPrin_agg
    schedPrin = sp - dqPrin
    store(2, schedPrin)
    sb = surv_prev * bal_next
    prepayPrin = sb * smm
    store(3, prepayPrin)
    refundPrin = sb * refund_smm
    store(4, refundPrin)

    default = b_bal * mdr + default_agg                    # == writedown before shift
    store(5, default)
    wd_shift = mxu(default, lag_mat)                       # shift right by recovery lag
    store(6, wd_shift)
    recovery = wd_shift * (1.0 - sev_eff)
    store(7, recovery)

    totalPrin = schedPrin + prepayPrin + recovery
    store(1, totalPrin)

    # ---- interest, fees, cashflow ------------------------------------------------
    compInt = prepayPrin * (rate * compIntHC)
    refundInt = refundPrin * rate
    actInt = rate * (b_bal * (1.0 - dq_mdr) - default_agg) - compInt - refundInt
    store(8, actInt)
    store(12, totalPrin + actInt)                          # CFL

    defaultBal = mxu(default - wd_shift, cum_mat)
    b_totalBal = b_bal + jnp.where(col_i < (TL - 1), defaultBal, 0.0)
    totalBal = act_bal + defaultBal
    store(9, (b_totalBal + totalBal) * ((0.5 / 12.0) * sfee))   # 'avg' servicing fee


def loan_amort_forward(loans_tensor, scenarios_tensor, block_loans=None, max_lag=None):
    """loans_tensor: [n_loans, 3] (wac, wam, pv); scenarios_tensor: [n_scenarios, 11, T].

    Returns (result [n_loans, n_scenarios, T + max_lag, 13], feature_names).
    """
    loans = jnp.asarray(loans_tensor, jnp.float32)
    scen = jnp.asarray(scenarios_tensor, jnp.float32)
    n_loans = loans.shape[0]
    n_scen, _, T = scen.shape

    lag_f = jnp.floor(scen[:, 9, 0])
    if max_lag is None:
        # TODO(synk): shape-determining host sync; pass max_lag explicitly (e.g. from
        # scenario metadata) to keep dispatch fully asynchronous.
        max_lag = int(jax.device_get(jnp.max(lag_f)))
    max_lag = max(int(max_lag), 0)
    TL = T + max_lag                                   # stored horizon
    TLp = ((TL + 127) // 128) * 128                    # lane-aligned compute width

    # ---- per-scenario curves; hoist per-scenario-only math ---------------------
    smm, dq, mdr = scen[:, 0, :], scen[:, 1, :], scen[:, 2, :]
    sev, refund, timing = scen[:, 3, :], scen[:, 4, :], scen[:, 6, :]
    p_surv = jnp.cumprod(1.0 - smm - refund - mdr, axis=1)

    def pad_lanes(x, last=False):
        pad = TLp - T
        if pad == 0:
            return x
        tail = (jnp.broadcast_to(x[:, -1:], (n_scen, pad)) if last
                else jnp.zeros((n_scen, pad), jnp.float32))
        return jnp.concatenate([x, tail], axis=1)

    rec_lag = jnp.clip(lag_f, 0.0, float(max_lag))
    col = jnp.arange(TLp, dtype=jnp.float32)[None, :]
    sev_eff = jnp.where(col < float(T) + rec_lag[:, None],
                        pad_lanes(sev, last=True), 0.0)

    series = jnp.stack(
        [pad_lanes(smm), pad_lanes(dq), pad_lanes(mdr), pad_lanes(refund),
         pad_lanes(timing), pad_lanes(p_surv, last=True), sev_eff,
         jnp.zeros((n_scen, TLp), jnp.float32)], axis=1)        # (n_scen, 8, TLp)

    scal = jnp.stack([scen[:, 5, 0], scen[:, 7, 0], scen[:, 8, 0]], axis=1)  # (S, 3)
    lag_i = rec_lag.astype(jnp.int32)[:, None]                               # (S, 1)
    # refund_premium (index 10) is unused by the reference cashflow math.

    # ---- VMEM budget / loan-block sizing ----------------------------------------
    try:
        vmem_cap = int(getattr(pltpu.get_tpu_info(), 'vmem_capacity_bytes',
                               64 * 1024 * 1024))
    except Exception:                      # conservative: assume v7x-sized (64 MiB) VMEM
        vmem_cap = 64 * 1024 * 1024
    vmem_limit = min((vmem_cap * 3) // 4, 100 * 1024 * 1024)

    if block_loans is None:
        # double-buffered 13-feature output block + ~32 live (BL, TLp) f32 slabs
        per_loan_row = (2 * N_FEATURES + 32) * TLp * 4
        block_loans = max(8, min(512, int(vmem_limit * 0.6) // per_loan_row))

    BL = max(8, ((min(block_loans, max(n_loans, 1)) + 7) // 8) * 8)
    NL = ((n_loans + BL - 1) // BL) * BL
    if NL > n_loans:
        loans = jnp.concatenate(
            [loans, jnp.broadcast_to(loans[-1:], (NL - n_loans, loans.shape[1]))],
            axis=0)

    kernel = functools.partial(_loan_kernel, T=T, TL=TL, TLp=TLp)

    out = pl.pallas_call(
        kernel,
        out_shape=jax.ShapeDtypeStruct((N_FEATURES, n_scen, NL, TL), jnp.float32),
        grid_spec=pltpu.PrefetchScalarGridSpec(
            num_scalar_prefetch=0,
            grid=(n_scen, NL // BL),
            in_specs=[
                pl.BlockSpec((BL, loans.shape[1]), lambda s, i: (i, 0)),
                pl.BlockSpec(memory_space=pltpu.MemorySpace.SMEM),   # scalars
                pl.BlockSpec(memory_space=pltpu.MemorySpace.SMEM),   # int recovery lag
                pl.BlockSpec((1, 8, TLp), lambda s, i: (s, 0, 0)),
            ],
            out_specs=pl.BlockSpec((N_FEATURES, 1, BL, TL),
                                   lambda s, i: (0, s, i, 0)),
        ),
        compiler_params=pltpu.CompilerParams(
            dimension_semantics=("parallel", "parallel"),
            vmem_limit_bytes=int(vmem_limit)),
    )(loans, scal, lag_i, series)

    out = out[:, :, :n_loans, :]
    # TODO(synk): the reference [loans, scen, T, 13] layout forces this feature-minor
    # transpose (an extra HBM pass); consumers that can accept the feature-major
    # (13, S, N, T) layout should use `out` directly.
    result = jnp.transpose(out, (2, 1, 3, 0))
    return result, FEATURE_NAMES


if __name__ == "__main__":
    key = jax.random.PRNGKey(0)
    n_loans, n_scenarios, T = 2, 4, 16
    ks = jax.random.split(key, 12)

    # loans: [n_loans, 3] = (wac, wam, pv); all wam == T (fully amortizing horizon)
    wac = jax.random.uniform(ks[0], (n_loans,), minval=0.03, maxval=0.09)
    wam = jnp.full((n_loans,), float(T))
    pv = jax.random.uniform(ks[1], (n_loans,), minval=1e5, maxval=5e5)
    loans = jnp.stack([wac, wam, pv], axis=1).astype(jnp.float32)

    def row(k, lo, hi):
        return jax.random.uniform(k, (n_scenarios, T), minval=lo, maxval=hi)

    smm = row(ks[2], 0.0, 0.02)
    dq = row(ks[3], 0.0, 0.01)
    mdr = row(ks[4], 0.0, 0.005)
    sev = row(ks[5], 0.2, 0.5)
    refund_smm = row(ks[6], 0.0, 0.003)
    aggMDR = jnp.broadcast_to(
        jax.random.uniform(ks[7], (n_scenarios, 1), minval=0.0, maxval=0.03),
        (n_scenarios, T))
    timing = jax.random.uniform(ks[8], (n_scenarios, T), minval=0.1, maxval=1.0)
    timing = timing / jnp.sum(timing, axis=1, keepdims=True)
    compIntHC = jnp.broadcast_to(
        jax.random.uniform(ks[9], (n_scenarios, 1), minval=0.0, maxval=1.0),
        (n_scenarios, T))
    sfee = jnp.broadcast_to(
        jax.random.uniform(ks[10], (n_scenarios, 1), minval=0.0025, maxval=0.01),
        (n_scenarios, T))
    rec_lag = jnp.broadcast_to(
        jnp.array([[1.0], [3.0], [2.0], [0.0]], jnp.float32), (n_scenarios, T))
    refund_prem = jnp.broadcast_to(
        jax.random.uniform(ks[11], (n_scenarios, 1), minval=0.0, maxval=0.02),
        (n_scenarios, T))

    scenarios = jnp.stack(
        [smm, dq, mdr, sev, refund_smm, aggMDR, timing, compIntHC, sfee,
         rec_lag, refund_prem], axis=1).astype(jnp.float32)

    # max_lag passed statically (known from scenario construction) -> no host sync.
    result, names = loan_amort_forward(loans, scenarios, max_lag=3)
    result = jax.block_until_ready(result)
    assert result.shape == (n_loans, n_scenarios, T + 3, len(names)), result.shape
    assert bool(jnp.all(jnp.isfinite(result)))
    print("KERNEL_OK")
</pallas_src>

<mosaic_0001>
module attributes {stable_mosaic.version = 11 : i64} {
  func.func @_loan_kernel(%arg0: i32, %arg1: i32, %arg2: memref<8x3xf32, #tpu.memory_space<vmem>>, %arg3: memref<4x3xf32, #tpu.memory_space<smem>>, %arg4: memref<4x1xi32, #tpu.memory_space<smem>>, %arg5: memref<1x8x128xf32, #tpu.memory_space<vmem>>, %arg6: memref<13x1x8x19xf32, #tpu.memory_space<vmem>>) attributes {dimension_semantics = [#tpu.dimension_semantics<parallel>, #tpu.dimension_semantics<parallel>], iteration_bounds = array<i64: 4, 1>, scalar_prefetch = 0 : i64, scratch_operands = 0 : i64, tpu.core_type = #tpu.core_type<tc>, window_params = [{transform_indices = @transform_0, window_bounds = array<i64: 8, 3>}, {transform_indices = @transform_1, window_bounds = array<i64: 4, 3>}, {transform_indices = @transform_2, window_bounds = array<i64: 4, 1>}, {transform_indices = @transform_3, window_bounds = array<i64: 1, 8, 128>}, {transform_indices = @transform_4, window_bounds = array<i64: 13, 1, 8, 19>}]} {
    %c0 = arith.constant 0 : index
    %c0_0 = arith.constant 0 : index
    %0 = vector.load %arg2[%c0, %c0_0] : memref<8x3xf32, #tpu.memory_space<vmem>>, vector<8x3xf32>
    %1 = vector.extract_strided_slice %0 {offsets = [0, 0], sizes = [8, 1], strides = [1, 1]} : vector<8x3xf32> to vector<8x1xf32>
    %2 = vector.extract_strided_slice %0 {offsets = [0, 1], sizes = [8, 1], strides = [1, 1]} : vector<8x3xf32> to vector<8x1xf32>
    %3 = vector.extract_strided_slice %0 {offsets = [0, 2], sizes = [8, 1], strides = [1, 1]} : vector<8x3xf32> to vector<8x1xf32>
    %4 = arith.index_cast %arg0 : i32 to index
    %c0_1 = arith.constant 0 : index
    %5 = memref.load %arg3[%4, %c0_1] : memref<4x3xf32, #tpu.memory_space<smem>>
    %6 = arith.index_cast %arg0 : i32 to index
    %c1 = arith.constant 1 : index
    %7 = memref.load %arg3[%6, %c1] : memref<4x3xf32, #tpu.memory_space<smem>>
    %8 = arith.index_cast %arg0 : i32 to index
    %c2 = arith.constant 2 : index
    %9 = memref.load %arg3[%8, %c2] : memref<4x3xf32, #tpu.memory_space<smem>>
    %10 = arith.index_cast %arg0 : i32 to index
    %c0_2 = arith.constant 0 : index
    %11 = memref.load %arg4[%10, %c0_2] : memref<4x1xi32, #tpu.memory_space<smem>>
    %c0_3 = arith.constant 0 : index
    %c0_4 = arith.constant 0 : index
    %c0_5 = arith.constant 0 : index
    %12 = vector.load %arg5[%c0_3, %c0_4, %c0_5] : memref<1x8x128xf32, #tpu.memory_space<vmem>>, vector<1x8x128xf32>
    %13 = vector.shape_cast %12 : vector<1x8x128xf32> to vector<8x128xf32>
    %14 = vector.extract_strided_slice %13 {offsets = [0, 0], sizes = [1, 128], strides = [1, 1]} : vector<8x128xf32> to vector<1x128xf32>
    %15 = vector.extract_strided_slice %13 {offsets = [1, 0], sizes = [1, 128], strides = [1, 1]} : vector<8x128xf32> to vector<1x128xf32>
    %16 = vector.extract_strided_slice %13 {offsets = [2, 0], sizes = [1, 128], strides = [1, 1]} : vector<8x128xf32> to vector<1x128xf32>
    %17 = vector.extract_strided_slice %13 {offsets = [3, 0], sizes = [1, 128], strides = [1, 1]} : vector<8x128xf32> to vector<1x128xf32>
    %18 = vector.extract_strided_slice %13 {offsets = [4, 0], sizes = [1, 128], strides = [1, 1]} : vector<8x128xf32> to vector<1x128xf32>
    %19 = vector.extract_strided_slice %13 {offsets = [5, 0], sizes = [1, 128], strides = [1, 1]} : vector<8x128xf32> to vector<1x128xf32>
    %20 = vector.extract_strided_slice %13 {offsets = [6, 0], sizes = [1, 128], strides = [1, 1]} : vector<8x128xf32> to vector<1x128xf32>
    %21 = tpu.iota {dimensions = array<i32: 1>} : vector<1x128xi32>
    %22 = arith.sitofp %21 : vector<1x128xi32> to vector<1x128xf32>
    %cst = arith.constant 1.000000e+00 : f32
    %23 = vector.broadcast %cst : f32 to vector<1x128xf32>
    %24 = arith.addf %22, %23 : vector<1x128xf32>
    %25 = vector.shape_cast %24 : vector<1x128xf32> to vector<1x128xf32>
    %26 = vector.broadcast %25 : vector<1x128xf32> to vector<8x128xf32>
    %27 = vector.extract_strided_slice %26 {offsets = [0, 0], sizes = [8, 19], strides = [1, 1]} : vector<8x128xf32> to vector<8x19xf32>
    %c0_6 = arith.constant 0 : index
    %c0_7 = arith.constant 0 : index
    %c0_8 = arith.constant 0 : index
    %c0_9 = arith.constant 0 : index
    %28 = vector.load %arg6[%c0_6, %c0_7, %c0_8, %c0_9] : memref<13x1x8x19xf32, #tpu.memory_space<vmem>>, vector<1x1x8x19xf32>
    %29 = vector.shape_cast %28 : vector<1x1x8x19xf32> to vector<8x19xf32>
    %30 = vector.shape_cast %27 : vector<8x19xf32> to vector<1x1x8x19xf32>
    tpu.vector_store %arg6[%c0_6, %c0_7, %c0_8, %c0_9], %30 {strides = array<i32>} : memref<13x1x8x19xf32, #tpu.memory_space<vmem>>, vector<1x1x8x19xf32>,
    %31 = tpu.iota {dimensions = array<i32: 0>} : vector<128x128xi32>
    %32 = tpu.iota {dimensions = array<i32: 1>} : vector<128x128xi32>
    %33 = arith.cmpi sle, %31, %32 : vector<128x128xi32>
    %34 = arith.extui %33 : vector<128x128xi1> to vector<128x128xi32>
    %35 = arith.sitofp %34 : vector<128x128xi32> to vector<128x128xf32>
    %36 = arith.subi %32, %31 : vector<128x128xi32>
    %37 = vector.broadcast %11 : i32 to vector<128x128xi32>
    %38 = arith.cmpi eq, %36, %37 : vector<128x128xi32>
    %39 = arith.extui %38 : vector<128x128xi1> to vector<128x128xi32>
    %40 = arith.sitofp %39 : vector<128x128xi32> to vector<128x128xf32>
    %cst_10 = arith.constant 1.200000e+01 : f32
    %41 = vector.broadcast %cst_10 : f32 to vector<8x1xf32>
    %42 = arith.divf %1, %41 : vector<8x1xf32>
    %cst_11 = arith.constant 1.000000e+00 : f32
    %43 = vector.broadcast %cst_11 : f32 to vector<8x1xf32>
    %44 = arith.addf %43, %42 : vector<8x1xf32>
    %45 = math.log %44 : vector<8x1xf32>
    %cst_12 = arith.constant 0.000000e+00 : f32
    %46 = vector.broadcast %cst_12 : f32 to vector<8x1xf32>
    %47 = arith.subf %46, %2 : vector<8x1xf32>
    %48 = arith.mulf %47, %45 : vector<8x1xf32>
    %49 = math.exp %48 : vector<8x1xf32>
    %cst_13 = arith.constant 1.000000e+00 : f32
    %50 = vector.broadcast %cst_13 : f32 to vector<8x1xf32>
    %51 = arith.subf %50, %49 : vector<8x1xf32>
    %cst_14 = arith.constant 1.000000e+00 : f32
    %52 = vector.broadcast %cst_14 : f32 to vector<8x1xf32>
    %53 = arith.divf %52, %51 : vector<8x1xf32>
    %54 = arith.mulf %3, %53 : vector<8x1xf32>
    %55 = arith.mulf %54, %42 : vector<8x1xf32>
    %56 = vector.broadcast %2 : vector<8x1xf32> to vector<8x128xf32>
    %57 = vector.broadcast %22 : vector<1x128xf32> to vector<8x128xf32>
    %58 = arith.subf %56, %57 : vector<8x128xf32>
    %cst_15 = arith.constant 0.000000e+00 : f32
    %59 = vector.broadcast %cst_15 : f32 to vector<8x128xf32>
    %60 = arith.subf %59, %58 : vector<8x128xf32>
    %61 = vector.broadcast %45 : vector<8x1xf32> to vector<8x128xf32>
    %62 = arith.mulf %60, %61 : vector<8x128xf32>
    %63 = math.exp %62 : vector<8x128xf32>
    %64 = vector.broadcast %22 : vector<1x128xf32> to vector<8x128xf32>
    %65 = vector.broadcast %2 : vector<8x1xf32> to vector<8x128xf32>
    %66 = arith.cmpf ole, %64, %65 : vector<8x128xf32>
    %cst_16 = arith.constant 1.000000e+00 : f32
    %67 = vector.broadcast %cst_16 : f32 to vector<8x128xf32>
    %68 = arith.subf %67, %63 : vector<8x128xf32>
    %69 = vector.broadcast %54 : vector<8x1xf32> to vector<8x128xf32>
    %70 = arith.mulf %69, %68 : vector<8x128xf32>
    %cst_17 = arith.constant 0.000000e+00 : f32
    %71 = vector.broadcast %cst_17 : f32 to vector<8x128xf32>
    %72 = arith.select %66, %70, %71 : vector<8x128xi1>, vector<8x128xf32>
    %cst_18 = arith.constant 1.000000e+00 : f32
    %73 = vector.broadcast %cst_18 : f32 to vector<1x128xf32>
    %74 = arith.addf %22, %73 : vector<1x128xf32>
    %75 = vector.broadcast %74 : vector<1x128xf32> to vector<8x128xf32>
    %76 = vector.broadcast %2 : vector<8x1xf32> to vector<8x128xf32>
    %77 = arith.cmpf ole, %75, %76 : vector<8x128xf32>
    %cst_19 = arith.constant 1.000000e+00 : f32
    %78 = vector.broadcast %cst_19 : f32 to vector<8x1xf32>
    %79 = arith.addf %78, %42 : vector<8x1xf32>
    %80 = vector.broadcast %79 : vector<8x1xf32> to vector<8x128xf32>
    %81 = arith.mulf %63, %80 : vector<8x128xf32>
    %cst_20 = arith.constant 1.000000e+00 : f32
    %82 = vector.broadcast %cst_20 : f32 to vector<8x128xf32>
    %83 = arith.subf %82, %81 : vector<8x128xf32>
    %84 = vector.broadcast %54 : vector<8x1xf32> to vector<8x128xf32>
    %85 = arith.mulf %84, %83 : vector<8x128xf32>
    %cst_21 = arith.constant 0.000000e+00 : f32
    %86 = vector.broadcast %cst_21 : f32 to vector<8x128xf32>
    %87 = arith.select %77, %85, %86 : vector<8x128xi1>, vector<8x128xf32>
    %cst_22 = arith.constant 1.600000e+01 : f32
    %88 = vector.broadcast %cst_22 : f32 to vector<1x128xf32>
    %89 = arith.cmpf olt, %22, %88 : vector<1x128xf32>
    %90 = vector.broadcast %42 : vector<8x1xf32> to vector<8x128xf32>
    %91 = arith.mulf %72, %90 : vector<8x128xf32>
    %92 = vector.broadcast %55 : vector<8x1xf32> to vector<8x128xf32>
    %93 = arith.subf %92, %91 : vector<8x128xf32>
    %cst_23 = arith.constant 0.000000e+00 : f32
    %94 = vector.shape_cast %89 : vector<1x128xi1> to vector<1x128xi1>
    %95 = vector.broadcast %94 : vector<1x128xi1> to vector<8x128xi1>
    %96 = vector.broadcast %cst_23 : f32 to vector<8x128xf32>
    %97 = arith.select %95, %93, %96 : vector<8x128xi1>, vector<8x128xf32>
    %cst_24 = arith.constant 0.000000e+00 : f32
    %98 = vector.broadcast %cst_24 : f32 to vector<8x128xf32>
    %99 = arith.cmpf ogt, %72, %98 : vector<8x128xf32>
    %cst_25 = arith.constant 1.000000e+00 : f32
    %100 = vector.broadcast %cst_25 : f32 to vector<8x128xf32>
    %101 = arith.select %99, %72, %100 : vector<8x128xi1>, vector<8x128xf32>
    %102 = arith.divf %97, %101 : vector<8x128xf32>
    %cst_26 = arith.constant 0.000000e+00 : f32
    %103 = vector.broadcast %cst_26 : f32 to vector<8x128xf32>
    %104 = arith.select %99, %102, %103 : vector<8x128xi1>, vector<8x128xf32>
    %105 = vector.broadcast %5 : f32 to vector<8x1xf32>
    %106 = arith.mulf %3, %105 : vector<8x1xf32>
    %107 = vector.broadcast %106 : vector<8x1xf32> to vector<8x128xf32>
    %108 = vector.broadcast %18 : vector<1x128xf32> to vector<8x128xf32>
    %109 = arith.mulf %107, %108 : vector<8x128xf32>
    %110 = arith.mulf %104, %109 : vector<8x128xf32>
    %111 = vector.broadcast %19 : vector<1x128xf32> to vector<8x128xf32>
    %112 = arith.mulf %72, %111 : vector<8x128xf32>
    %cst_27 = arith.constant 9.99999996E-13 : f32
    %113 = vector.broadcast %cst_27 : f32 to vector<8x128xf32>
    %114 = arith.addf %112, %113 : vector<8x128xf32>
    %115 = arith.divf %109, %114 : vector<8x128xf32>
    %cst_28 = arith.constant dense<0.000000e+00> : vector<8x128xf32>
    %116 = tpu.matmul %115, %35, %cst_28 {dimension_numbers = #tpu.dot_dimension_numbers<[1], [0], [0], [1], [0, 0, 1, 1], [], []>, precision = #tpu.contract_precision<fp32>} : vector<8x128xf32>, vector<128x128xf32>, vector<8x128xf32> -> vector<8x128xf32>
    %cst_29 = arith.constant 1.000000e+00 : f32
    %117 = vector.broadcast %cst_29 : f32 to vector<8x128xf32>
    %118 = arith.subf %117, %116 : vector<8x128xf32>
    %119 = vector.broadcast %19 : vector<1x128xf32> to vector<8x128xf32>
    %120 = arith.mulf %119, %118 : vector<8x128xf32>
    %c1_i32 = arith.constant 1 : i32
    %121 = vector.broadcast %c1_i32 : i32 to vector<1x128xi32>
    %122 = arith.cmpi sge, %21, %121 : vector<1x128xi32>
    %c1_i32_30 = arith.constant 1 : i32
    %123 = tpu.dynamic_rotate %120 by %c1_i32_30 dim 1 : vector<8x128xf32>, i32 -> vector<8x128xf32>
    %cst_31 = arith.constant 1.000000e+00 : f32
    %124 = vector.shape_cast %122 : vector<1x128xi1> to vector<1x128xi1>
    %125 = vector.broadcast %124 : vector<1x128xi1> to vector<8x128xi1>
    %126 = vector.broadcast %cst_31 : f32 to vector<8x128xf32>
    %127 = arith.select %125, %123, %126 : vector<8x128xi1>, vector<8x128xf32>
    %128 = arith.mulf %127, %72 : vector<8x128xf32>
    %129 = vector.extract_strided_slice %128 {offsets = [0, 0], sizes = [8, 19], strides = [1, 1]} : vector<8x128xf32> to vector<8x19xf32>
    %c10 = arith.constant 10 : index
    %c0_32 = arith.constant 0 : index
    %c0_33 = arith.constant 0 : index
    %c0_34 = arith.constant 0 : index
    %130 = vector.load %arg6[%c10, %c0_32, %c0_33, %c0_34] : memref<13x1x8x19xf32, #tpu.memory_space<vmem>>, vector<1x1x8x19xf32>
    %131 = vector.shape_cast %130 : vector<1x1x8x19xf32> to vector<8x19xf32>
    %132 = vector.shape_cast %129 : vector<8x19xf32> to vector<1x1x8x19xf32>
    tpu.vector_store %arg6[%c10, %c0_32, %c0_33, %c0_34], %132 {strides = array<i32>} : memref<13x1x8x19xf32, #tpu.memory_space<vmem>>, vector<1x1x8x19xf32>,
    %133 = arith.mulf %120, %87 : vector<8x128xf32>
    %134 = vector.extract_strided_slice %133 {offsets = [0, 0], sizes = [8, 19], strides = [1, 1]} : vector<8x128xf32> to vector<8x19xf32>
    %c11 = arith.constant 11 : index
    %c0_35 = arith.constant 0 : index
    %c0_36 = arith.constant 0 : index
    %c0_37 = arith.constant 0 : index
    %135 = vector.load %arg6[%c11, %c0_35, %c0_36, %c0_37] : memref<13x1x8x19xf32, #tpu.memory_space<vmem>>, vector<1x1x8x19xf32>
    %136 = vector.shape_cast %135 : vector<1x1x8x19xf32> to vector<8x19xf32>
    %137 = vector.shape_cast %134 : vector<8x19xf32> to vector<1x1x8x19xf32>
    tpu.vector_store %arg6[%c11, %c0_35, %c0_36, %c0_37], %137 {strides = array<i32>} : memref<13x1x8x19xf32, #tpu.memory_space<vmem>>, vector<1x1x8x19xf32>,
    %138 = arith.addf %15, %16 : vector<1x128xf32>
    %139 = arith.mulf %127, %97 : vector<8x128xf32>
    %140 = vector.broadcast %138 : vector<1x128xf32> to vector<8x128xf32>
    %141 = arith.mulf %139, %140 : vector<8x128xf32>
    %142 = arith.addf %141, %110 : vector<8x128xf32>
    %143 = arith.subf %139, %142 : vector<8x128xf32>
    %144 = vector.extract_strided_slice %143 {offsets = [0, 0], sizes = [8, 19], strides = [1, 1]} : vector<8x128xf32> to vector<8x19xf32>
    %c2_38 = arith.constant 2 : index
    %c0_39 = arith.constant 0 : index
    %c0_40 = arith.constant 0 : index
    %c0_41 = arith.constant 0 : index
    %145 = vector.load %arg6[%c2_38, %c0_39, %c0_40, %c0_41] : memref<13x1x8x19xf32, #tpu.memory_space<vmem>>, vector<1x1x8x19xf32>
    %146 = vector.shape_cast %145 : vector<1x1x8x19xf32> to vector<8x19xf32>
    %147 = vector.shape_cast %144 : vector<8x19xf32> to vector<1x1x8x19xf32>
    tpu.vector_store %arg6[%c2_38, %c0_39, %c0_40, %c0_41], %147 {strides = array<i32>} : memref<13x1x8x19xf32, #tpu.memory_space<vmem>>, vector<1x1x8x19xf32>,
    %148 = arith.mulf %127, %87 : vector<8x128xf32>
    %149 = vector.broadcast %14 : vector<1x128xf32> to vector<8x128xf32>
    %150 = arith.mulf %148, %149 : vector<8x128xf32>
    %151 = vector.extract_strided_slice %150 {offsets = [0, 0], sizes = [8, 19], strides = [1, 1]} : vector<8x128xf32> to vector<8x19xf32>
    %c3 = arith.constant 3 : index
    %c0_42 = arith.constant 0 : index
    %c0_43 = arith.constant 0 : index
    %c0_44 = arith.constant 0 : index
    %152 = vector.load %arg6[%c3, %c0_42, %c0_43, %c0_44] : memref<13x1x8x19xf32, #tpu.memory_space<vmem>>, vector<1x1x8x19xf32>
    %153 = vector.shape_cast %152 : vector<1x1x8x19xf32> to vector<8x19xf32>
    %154 = vector.shape_cast %151 : vector<8x19xf32> to vector<1x1x8x19xf32>
    tpu.vector_store %arg6[%c3, %c0_42, %c0_43, %c0_44], %154 {strides = array<i32>} : memref<13x1x8x19xf32, #tpu.memory_space<vmem>>, vector<1x1x8x19xf32>,
    %155 = vector.broadcast %17 : vector<1x128xf32> to vector<8x128xf32>
    %156 = arith.mulf %148, %155 : vector<8x128xf32>
    %157 = vector.extract_strided_slice %156 {offsets = [0, 0], sizes = [8, 19], strides = [1, 1]} : vector<8x128xf32> to vector<8x19xf32>
    %c4 = arith.constant 4 : index
    %c0_45 = arith.constant 0 : index
    %c0_46 = arith.constant 0 : index
    %c0_47 = arith.constant 0 : index
    %158 = vector.load %arg6[%c4, %c0_45, %c0_46, %c0_47] : memref<13x1x8x19xf32, #tpu.memory_space<vmem>>, vector<1x1x8x19xf32>
    %159 = vector.shape_cast %158 : vector<1x1x8x19xf32> to vector<8x19xf32>
    %160 = vector.shape_cast %157 : vector<8x19xf32> to vector<1x1x8x19xf32>
    tpu.vector_store %arg6[%c4, %c0_45, %c0_46, %c0_47], %160 {strides = array<i32>} : memref<13x1x8x19xf32, #tpu.memory_space<vmem>>, vector<1x1x8x19xf32>,
    %161 = vector.broadcast %16 : vector<1x128xf32> to vector<8x128xf32>
    %162 = arith.mulf %128, %161 : vector<8x128xf32>
    %163 = arith.addf %162, %109 : vector<8x128xf32>
    %164 = vector.extract_strided_slice %163 {offsets = [0, 0], sizes = [8, 19], strides = [1, 1]} : vector<8x128xf32> to vector<8x19xf32>
    %c5 = arith.constant 5 : index
    %c0_48 = arith.constant 0 : index
    %c0_49 = arith.constant 0 : index
    %c0_50 = arith.constant 0 : index
    %165 = vector.load %arg6[%c5, %c0_48, %c0_49, %c0_50] : memref<13x1x8x19xf32, #tpu.memory_space<vmem>>, vector<1x1x8x19xf32>
    %166 = vector.shape_cast %165 : vector<1x1x8x19xf32> to vector<8x19xf32>
    %167 = vector.shape_cast %164 : vector<8x19xf32> to vector<1x1x8x19xf32>
    tpu.vector_store %arg6[%c5, %c0_48, %c0_49, %c0_50], %167 {strides = array<i32>} : memref<13x1x8x19xf32, #tpu.memory_space<vmem>>, vector<1x1x8x19xf32>,
    %cst_51 = arith.constant dense<0.000000e+00> : vector<8x128xf32>
    %168 = tpu.matmul %163, %40, %cst_51 {dimension_numbers = #tpu.dot_dimension_numbers<[1], [0], [0], [1], [0, 0, 1, 1], [], []>, precision = #tpu.contract_precision<fp32>} : vector<8x128xf32>, vector<128x128xf32>, vector<8x128xf32> -> vector<8x128xf32>
    %169 = vector.extract_strided_slice %168 {offsets = [0, 0], sizes = [8, 19], strides = [1, 1]} : vector<8x128xf32> to vector<8x19xf32>
    %c6 = arith.constant 6 : index
    %c0_52 = arith.constant 0 : index
    %c0_53 = arith.constant 0 : index
    %c0_54 = arith.constant 0 : index
    %170 = vector.load %arg6[%c6, %c0_52, %c0_53, %c0_54] : memref<13x1x8x19xf32, #tpu.memory_space<vmem>>, vector<1x1x8x19xf32>
    %171 = vector.shape_cast %170 : vector<1x1x8x19xf32> to vector<8x19xf32>
    %172 = vector.shape_cast %169 : vector<8x19xf32> to vector<1x1x8x19xf32>
    tpu.vector_store %arg6[%c6, %c0_52, %c0_53, %c0_54], %172 {strides = array<i32>} : memref<13x1x8x19xf32, #tpu.memory_space<vmem>>, vector<1x1x8x19xf32>,
    %cst_55 = arith.constant 1.000000e+00 : f32
    %173 = vector.broadcast %cst_55 : f32 to vector<1x128xf32>
    %174 = arith.subf %173, %20 : vector<1x128xf32>
    %175 = vector.broadcast %174 : vector<1x128xf32> to vector<8x128xf32>
    %176 = arith.mulf %168, %175 : vector<8x128xf32>
    %177 = vector.extract_strided_slice %176 {offsets = [0, 0], sizes = [8, 19], strides = [1, 1]} : vector<8x128xf32> to vector<8x19xf32>
    %c7 = arith.constant 7 : index
    %c0_56 = arith.constant 0 : index
    %c0_57 = arith.constant 0 : index
    %c0_58 = arith.constant 0 : index
    %178 = vector.load %arg6[%c7, %c0_56, %c0_57, %c0_58] : memref<13x1x8x19xf32, #tpu.memory_space<vmem>>, vector<1x1x8x19xf32>
    %179 = vector.shape_cast %178 : vector<1x1x8x19xf32> to vector<8x19xf32>
    %180 = vector.shape_cast %177 : vector<8x19xf32> to vector<1x1x8x19xf32>
    tpu.vector_store %arg6[%c7, %c0_56, %c0_57, %c0_58], %180 {strides = array<i32>} : memref<13x1x8x19xf32, #tpu.memory_space<vmem>>, vector<1x1x8x19xf32>,
    %181 = arith.addf %143, %150 : vector<8x128xf32>
    %182 = arith.addf %181, %176 : vector<8x128xf32>
    %183 = vector.extract_strided_slice %182 {offsets = [0, 0], sizes = [8, 19], strides = [1, 1]} : vector<8x128xf32> to vector<8x19xf32>
    %c1_59 = arith.constant 1 : index
    %c0_60 = arith.constant 0 : index
    %c0_61 = arith.constant 0 : index
    %c0_62 = arith.constant 0 : index
    %184 = vector.load %arg6[%c1_59, %c0_60, %c0_61, %c0_62] : memref<13x1x8x19xf32, #tpu.memory_space<vmem>>, vector<1x1x8x19xf32>
    %185 = vector.shape_cast %184 : vector<1x1x8x19xf32> to vector<8x19xf32>
    %186 = vector.shape_cast %183 : vector<8x19xf32> to vector<1x1x8x19xf32>
    tpu.vector_store %arg6[%c1_59, %c0_60, %c0_61, %c0_62], %186 {strides = array<i32>} : memref<13x1x8x19xf32, #tpu.memory_space<vmem>>, vector<1x1x8x19xf32>,
    %187 = vector.broadcast %7 : f32 to vector<8x1xf32>
    %188 = arith.mulf %42, %187 : vector<8x1xf32>
    %189 = vector.broadcast %188 : vector<8x1xf32> to vector<8x128xf32>
    %190 = arith.mulf %150, %189 : vector<8x128xf32>
    %191 = vector.broadcast %42 : vector<8x1xf32> to vector<8x128xf32>
    %192 = arith.mulf %156, %191 : vector<8x128xf32>
    %cst_63 = arith.constant 1.000000e+00 : f32
    %193 = vector.broadcast %cst_63 : f32 to vector<1x128xf32>
    %194 = arith.subf %193, %138 : vector<1x128xf32>
    %195 = vector.broadcast %194 : vector<1x128xf32> to vector<8x128xf32>
    %196 = arith.mulf %128, %195 : vector<8x128xf32>
    %197 = arith.subf %196, %109 : vector<8x128xf32>
    %198 = vector.broadcast %42 : vector<8x1xf32> to vector<8x128xf32>
    %199 = arith.mulf %198, %197 : vector<8x128xf32>
    %200 = arith.subf %199, %190 : vector<8x128xf32>
    %201 = arith.subf %200, %192 : vector<8x128xf32>
    %202 = vector.extract_strided_slice %201 {offsets = [0, 0], sizes = [8, 19], strides = [1, 1]} : vector<8x128xf32> to vector<8x19xf32>
    %c8 = arith.constant 8 : index
    %c0_64 = arith.constant 0 : index
    %c0_65 = arith.constant 0 : index
    %c0_66 = arith.constant 0 : index
    %203 = vector.load %arg6[%c8, %c0_64, %c0_65, %c0_66] : memref<13x1x8x19xf32, #tpu.memory_space<vmem>>, vector<1x1x8x19xf32>
    %204 = vector.shape_cast %203 : vector<1x1x8x19xf32> to vector<8x19xf32>
    %205 = vector.shape_cast %202 : vector<8x19xf32> to vector<1x1x8x19xf32>
    tpu.vector_store %arg6[%c8, %c0_64, %c0_65, %c0_66], %205 {strides = array<i32>} : memref<13x1x8x19xf32, #tpu.memory_space<vmem>>, vector<1x1x8x19xf32>,
    %206 = arith.addf %182, %201 : vector<8x128xf32>
    %207 = vector.extract_strided_slice %206 {offsets = [0, 0], sizes = [8, 19], strides = [1, 1]} : vector<8x128xf32> to vector<8x19xf32>
    %c12 = arith.constant 12 : index
    %c0_67 = arith.constant 0 : index
    %c0_68 = arith.constant 0 : index
    %c0_69 = arith.constant 0 : index
    %208 = vector.load %arg6[%c12, %c0_67, %c0_68, %c0_69] : memref<13x1x8x19xf32, #tpu.memory_space<vmem>>, vector<1x1x8x19xf32>
    %209 = vector.shape_cast %208 : vector<1x1x8x19xf32> to vector<8x19xf32>
    %210 = vector.shape_cast %207 : vector<8x19xf32> to vector<1x1x8x19xf32>
    tpu.vector_store %arg6[%c12, %c0_67, %c0_68, %c0_69], %210 {strides = array<i32>} : memref<13x1x8x19xf32, #tpu.memory_space<vmem>>, vector<1x1x8x19xf32>,
    %211 = arith.subf %163, %168 : vector<8x128xf32>
    %cst_70 = arith.constant dense<0.000000e+00> : vector<8x128xf32>
    %212 = tpu.matmul %211, %35, %cst_70 {dimension_numbers = #tpu.dot_dimension_numbers<[1], [0], [0], [1], [0, 0, 1, 1], [], []>, precision = #tpu.contract_precision<fp32>} : vector<8x128xf32>, vector<128x128xf32>, vector<8x128xf32> -> vector<8x128xf32>
    %c18_i32 = arith.constant 18 : i32
    %213 = vector.broadcast %c18_i32 : i32 to vector<1x128xi32>
    %214 = arith.cmpi slt, %21, %213 : vector<1x128xi32>
    %cst_71 = arith.constant 0.000000e+00 : f32
    %215 = vector.shape_cast %214 : vector<1x128xi1> to vector<1x128xi1>
    %216 = vector.broadcast %215 : vector<1x128xi1> to vector<8x128xi1>
    %217 = vector.broadcast %cst_71 : f32 to vector<8x128xf32>
    %218 = arith.select %216, %212, %217 : vector<8x128xi1>, vector<8x128xf32>
    %219 = arith.addf %128, %218 : vector<8x128xf32>
    %220 = arith.addf %133, %212 : vector<8x128xf32>
    %221 = arith.addf %219, %220 : vector<8x128xf32>
    %cst_72 = arith.constant 0.0416666679 : f32
    %222 = arith.mulf %cst_72, %9 : f32
    %223 = vector.broadcast %222 : f32 to vector<8x128xf32>
    %224 = arith.mulf %221, %223 : vector<8x128xf32>
    %225 = vector.extract_strided_slice %224 {offsets = [0, 0], sizes = [8, 19], strides = [1, 1]} : vector<8x128xf32> to vector<8x19xf32>
    %c9 = arith.constant 9 : index
    %c0_73 = arith.constant 0 : index
    %c0_74 = arith.constant 0 : index
    %c0_75 = arith.constant 0 : index
    %226 = vector.load %arg6[%c9, %c0_73, %c0_74, %c0_75] : memref<13x1x8x19xf32, #tpu.memory_space<vmem>>, vector<1x1x8x19xf32>
    %227 = vector.shape_cast %226 : vector<1x1x8x19xf32> to vector<8x19xf32>
    %228 = vector.shape_cast %225 : vector<8x19xf32> to vector<1x1x8x19xf32>
    tpu.vector_store %arg6[%c9, %c0_73, %c0_74, %c0_75], %228 {strides = array<i32>} : memref<13x1x8x19xf32, #tpu.memory_space<vmem>>, vector<1x1x8x19xf32>,
    return
  }
  func.func @transform_0(%arg0: i32, %arg1: i32) -> (i32, i32) {
    %c0_i32 = arith.constant 0 : i32
    %c0_i32_0 = arith.constant 0 : i32
    return %arg1, %c0_i32 : i32, i32
  }
  func.func @transform_1(%arg0: i32, %arg1: i32) -> (i32, i32) {
    %c0_i32 = arith.constant 0 : i32
    %c0_i32_0 = arith.constant 0 : i32
    %c0_i32_1 = arith.constant 0 : i32
    return %c0_i32, %c0_i32_0 : i32, i32
  }
  func.func @transform_2(%arg0: i32, %arg1: i32) -> (i32, i32) {
    %c0_i32 = arith.constant 0 : i32
    %c0_i32_0 = arith.constant 0 : i32
    %c0_i32_1 = arith.constant 0 : i32
    return %c0_i32, %c0_i32_0 : i32, i32
  }
  func.func @transform_3(%arg0: i32, %arg1: i32) -> (i32, i32, i32) {
    %c0_i32 = arith.constant 0 : i32
    %c0_i32_0 = arith.constant 0 : i32
    %c0_i32_1 = arith.constant 0 : i32
    return %arg0, %c0_i32, %c0_i32_0 : i32, i32, i32
  }
  func.func @transform_4(%arg0: i32, %arg1: i32) -> (i32, i32, i32, i32) {
    %c0_i32 = arith.constant 0 : i32
    %c0_i32_0 = arith.constant 0 : i32
    %c0_i32_1 = arith.constant 0 : i32
    return %c0_i32, %arg0, %arg1, %c0_i32_0 : i32, i32, i32, i32
  }
}

</mosaic_0001>

<llo_original>
// kernel: tpu_custom_call.1
$region0: #{tpu_custom_call.1}
  #allocation0 [shape = 'u32[]', space=smem, size = 0x4, offset = 0x4, fixed_abs, tag = 'smem constant byte address 0x4 - core index']
  #allocation1 [shape = 'u32[144,128]{1,0:T(1,128)}', space=vmem, size = 0x12000, scoped, tag = 'internal scratch']
  %s0 = inlined_call_operand.vmem [shape: f32[8,3], index: 0, kind: input, shape index: {}]
  %s1 = inlined_call_operand.vmem [shape: f32[4,3], index: 1, kind: input, shape index: {}]
  %s2 = inlined_call_operand.vmem [shape: s32[4,1], index: 2, kind: input, shape index: {}]
  %s3 = inlined_call_operand.hbm [shape: f32[4,8,128], index: 3, kind: input, shape index: {}]
  %s4 = inlined_call_operand.hbm [shape: f32[13,4,8,19], index: 4, kind: output, shape index: {}]
  %s5 = sld [smem:[#allocation0]]
  $region61: #{tpu_custom_call.1} parent=0
    _
  %s7 = ssub.s32 1, %s5
  %s8 = scalar_select 0, %s7, %s5
  $region1: #{tpu_custom_call.1} parent=0
    #allocation2 [shape = 'u8[2048]{0}', space=smem, size = 0x800, scoped, tag = 'input window, operand 1, single buffered']
    #allocation3 [shape = 's32[2]{0}', space=sflag, size = 0x8, scoped, tag = 'scoped memory for tpu_custom_call.1']
    #allocation4 [shape = 's32[2]{0}', space=sflag, size = 0x8, scoped, tag = 'scoped memory for tpu_custom_call.1']
    #allocation5 [shape = 's32[2]{0}', space=sflag, size = 0x8, scoped, tag = 'scoped memory for tpu_custom_call.1']
    #allocation6 [shape = 'u8[2048]{0}', space=smem, size = 0x800, scoped, tag = 'input window, operand 2, single buffered']
    #allocation7 [shape = 's32[1]{0}', space=sflag, size = 0x4, scoped, tag = 'scoped memory for tpu_custom_call.1']
    #allocation8 [shape = 'u8[8192]{0}', space=vmem, size = 0x2000, scoped, tag = 'input window, operand 3']
    #allocation9 [shape = 'u8[106496]{0}', space=vmem, size = 0x1a000, scoped, tag = 'output window, operand 0']
    %9 = vsyncpa [#allocation5], 0
    %10 = vsyncpa [#allocation7], 0
    %11 = vsyncpa [#allocation3], 0
    %s12 = scalar_lea.sflag [#allocation3], 1
    %13 = vsyncpa %s12, 0
    %14 = vsyncpa [#allocation4], 0
    %s15 = scalar_lea.sflag [#allocation4], 1
    %16 = vsyncpa %s15, 0
    loop: start=0, step=1, limit=6
    $region2: #{tpu_custom_call.1} parent=1 // loop_pre_header
      _
    $region3: #{tpu_custom_call.1} parent=1 // loop_header
      %s18 = sphi 0, %s22
      %p19 = scmp.ge.s32.totalorder %s18, 6
      %s25 = sphi 0, %s37
      %s26 = sphi 0, %s33
      %s27 = sphi 0, %s25
      %s28 = sphi 0, %s26
      %s29 = sphi 0, %s27
      %s30 = sphi 0, %s28
      %s40 = sphi 0, %s42
      %s43 = sphi 0, %s40
      %s44 = sphi 0, %s43
      %s60 = sphi 0, %s44
      %s64 = sphi 0, %s64
      %s66 = sphi 0, %s64
      %s67 = sphi 0, %s66
      %s81 = sphi 0, %s67
      %s85 = sphi 0, %s85
      %s87 = sphi 0, %s85
      %s88 = sphi 0, %s87
      %s102 = sphi 0, %s88
      %s108 = sphi 0, %s110
      %s111 = sphi 0, %s108
      %s112 = sphi 0, %s111
      %s128 = sphi 0, %s112
      %s136 = sphi 0, %s138
      %s139 = sphi 0, %s136
      %s140 = sphi 0, %s139
      %s156 = sphi 0, %s140
    $region4: #{tpu_custom_call.1} parent=1 // loop_header_branch
      %21 = sbr.rel (%p19) target = $region8
    $region5: #{tpu_custom_call.1} parent=1 // loop_body
      %s23 = ssub.s32 %s18, 1
      %s24 = ssub.s32 %s18, 2
      %s31 = sadd.s32 1, %s26
      %p32 = scmp.ge.s32.totalorder %s31, 1
      %s33 = scalar_select %p32, 0, %s31
      %s34 = sadd.s32 1, %s25
      %s35 = scalar_select %p32, %s34, %s25
      %p36 = scmp.ge.s32.totalorder %s35, 4
      %s37 = scalar_select %p36, 0, %s35
      %s38 = ssub.s32 %s26, %s33
      %p39 = scmp.eq.s32.totalorder %s38, 0
      %s41 = sadd.s32 %s40, 1
      %s42 = scalar_select %p39, %s40, %s41
      %p45 = pneg %p39
      %p46 = scmp.eq.s32.totalorder %s18, 3
      %p47 = por %p45, %p46
      %p48 = scmp.ne.s32.totalorder %s40, %s43
      %p49 = scmp.eq.s32.totalorder %s18, 0
      %p50 = por %p48, %p49
      %p51 = scmp.ne.s32.totalorder %s40, %s43
      %p52 = scmp.eq.s32.totalorder %s23, 3
      %p53 = por %p51, %p52
      %p54 = scmp.ne.s32.totalorder %s43, %s44
      %p55 = scmp.eq.s32.totalorder %s23, 0
      %p56 = por %p54, %p55
      %p57 = scmp.ne.s32.totalorder %s43, %s44
      %p58 = scmp.eq.s32.totalorder %s24, 3
      %p59 = por %p57, %p58
      %p61 = scmp.ne.s32.totalorder %s44, %s60
      %p62 = scmp.eq.s32.totalorder %s24, 0
      %p63 = por %p61, %p62
      %s65 = sadd.s32 %s64, 1
      %p68 = scmp.eq.s32.totalorder %s18, 3
      %p69 = scmp.ne.s32.totalorder %s64, %s66
      %p70 = scmp.eq.s32.totalorder %s18, 0
      %p71 = por %p69, %p70
      %p72 = scmp.ne.s32.totalorder %s64, %s66
      %p73 = scmp.eq.s32.totalorder %s23, 3
      %p74 = por %p72, %p73
      %p75 = scmp.ne.s32.totalorder %s66, %s67
      %p76 = scmp.eq.s32.totalorder %s23, 0
      %p77 = por %p75, %p76
      %p78 = scmp.ne.s32.totalorder %s66, %s67
      %p79 = scmp.eq.s32.totalorder %s24, 3
      %p80 = por %p78, %p79
      %p82 = scmp.ne.s32.totalorder %s67, %s81
      %p83 = scmp.eq.s32.totalorder %s24, 0
      %p84 = por %p82, %p83
      %s86 = sadd.s32 %s85, 1
      %p89 = scmp.eq.s32.totalorder %s18, 3
      %p90 = scmp.ne.s32.totalorder %s85, %s87
      %p91 = scmp.eq.s32.totalorder %s18, 0
      %p92 = por %p90, %p91
      %p93 = scmp.ne.s32.totalorder %s85, %s87
      %p94 = scmp.eq.s32.totalorder %s23, 3
      %p95 = por %p93, %p94
      %p96 = scmp.ne.s32.totalorder %s87, %s88
      %p97 = scmp.eq.s32.totalorder %s23, 0
      %p98 = por %p96, %p97
      %p99 = scmp.ne.s32.totalorder %s87, %s88
      %p100 = scmp.eq.s32.totalorder %s24, 3
      %p101 = por %p99, %p100
      %p103 = scmp.ne.s32.totalorder %s88, %s102
      %p104 = scmp.eq.s32.totalorder %s24, 0
      %p105 = por %p103, %p104
      %s106 = ssub.s32 %s25, %s37
      %p107 = scmp.eq.s32.totalorder %s106, 0
      %s109 = sadd.s32 %s108, 1
      %s110 = scalar_select %p107, %s108, %s109
      %p113 = pneg %p107
      %p114 = scmp.eq.s32.totalorder %s18, 3
      %p115 = por %p113, %p114
      %p116 = scmp.ne.s32.totalorder %s108, %s111
      %p117 = scmp.eq.s32.totalorder %s18, 0
      %p118 = por %p116, %p117
      %p119 = scmp.ne.s32.totalorder %s108, %s111
      %p120 = scmp.eq.s32.totalorder %s23, 3
      %p121 = por %p119, %p120
      %p122 = scmp.ne.s32.totalorder %s111, %s112
      %p123 = scmp.eq.s32.totalorder %s23, 0
      %p124 = por %p122, %p123
      %p125 = scmp.ne.s32.totalorder %s111, %s112
      %p126 = scmp.eq.s32.totalorder %s24, 3
      %p127 = por %p125, %p126
      %p129 = scmp.ne.s32.totalorder %s112, %s128
      %p130 = scmp.eq.s32.totalorder %s24, 0
      %p131 = por %p129, %p130
      %s132 = ssub.s32 %s25, %s37
      %s133 = ssub.s32 %s26, %s33
      %s134 = sor.u32 %s132, %s133
      %p135 = scmp.eq.s32.totalorder %s134, 0
      %s137 = sadd.s32 %s136, 1
      %s138 = scalar_select %p135, %s136, %s137
      %p141 = pneg %p135
      %p142 = scmp.eq.s32.totalorder %s18, 3
      %p143 = por %p141, %p142
      %p144 = scmp.ne.s32.totalorder %s136, %s139
      %p145 = scmp.eq.s32.totalorder %s18, 0
      %p146 = por %p144, %p145
      %p147 = scmp.ne.s32.totalorder %s136, %s139
      %p148 = scmp.eq.s32.totalorder %s23, 3
      %p149 = por %p147, %p148
      %p150 = scmp.ne.s32.totalorder %s139, %s140
      %p151 = scmp.eq.s32.totalorder %s23, 0
      %p152 = por %p150, %p151
      %p153 = scmp.ne.s32.totalorder %s139, %s140
      %p154 = scmp.eq.s32.totalorder %s24, 3
      %p155 = por %p153, %p154
      %p157 = scmp.ne.s32.totalorder %s140, %s156
      %p158 = scmp.eq.s32.totalorder %s24, 0
      %p159 = por %p157, %p158
      %p160 = scmp.le.s32.totalorder 1, %s18
      %p161 = scmp.lt.s32.totalorder %s18, 5
      %p162 = pnand %p160, %p161
      %p163 = pneg %p162
      // Predicated region
      $region9: #{tpu_custom_call.1} parent=5 // pred_check
        _
      $region10: #{tpu_custom_call.1} parent=5 // pred_check_branch
        %165 = sbr.rel (%p162) target = $region12
      $region11: #{tpu_custom_call.1} parent=5 // pred_region
        %s166 = ssub.s32 %s18, 1
        // Predicated region
        $region13: #{tpu_custom_call.1} parent=11 // pred_check
          %p167 = pneg %p56
        $region14: #{tpu_custom_call.1} parent=11 // pred_check_branch
          %169 = sbr.rel (%p167) target = $region16
        $region15: #{tpu_custom_call.1} parent=11 // pred_region
          %p170 = scmp.lt.s32.totalorder %s28, 0
          %s171 = scalar_select %p170, %s28, 0
          %s172 = smul.addr %s171, 8
          %s173 = scalar_lea.vmem %s0, %s172
        $region16: #{tpu_custom_call.1} parent=11 // pred_fallthru
          _
        // Predicated region
        $region17: #{tpu_custom_call.1} parent=11 // pred_check
          %p174 = pneg %p77
        $region18: #{tpu_custom_call.1} parent=11 // pred_check_branch
          %176 = sbr.rel (%p174) target = $region20
        $region19: #{tpu_custom_call.1} parent=11 // pred_region
          %s178 = ssub.s32 64, 64
          %179 = vsyncadd [#allocation5], %s178
          %s181 = sshll.u32 %s1, 4
          %s182 = int_to_ptr.vmem [resolvable:$true] %s181
          %184 = dma.vmem_to_smem %s182, 64, [#allocation2], [#allocation5]
        $region20: #{tpu_custom_call.1} parent=11 // pred_fallthru
          _
        // Predicated region
        $region21: #{tpu_custom_call.1} parent=11 // pred_check
          %p185 = pneg %p98
        $region22: #{tpu_custom_call.1} parent=11 // pred_check_branch
          %187 = sbr.rel (%p185) target = $region24
        $region23: #{tpu_custom_call.1} parent=11 // pred_region
          %s189 = ssub.s32 64, 64
          %190 = vsyncadd [#allocation7], %s189
          %s192 = sshll.u32 %s2, 4
          %s193 = int_to_ptr.vmem [resolvable:$true] %s192
          %195 = dma.vmem_to_smem %s193, 64, [#allocation6], [#allocation7]
        $region24: #{tpu_custom_call.1} parent=11 // pred_fallthru
          _
      $region12: #{tpu_custom_call.1} parent=5 // pred_fallthru
        _
      %p196 = scmp.lt.s32.totalorder %s18, 4
      // Predicated region
      $region25: #{tpu_custom_call.1} parent=5 // pred_check
        %p197 = pneg %p196
      $region26: #{tpu_custom_call.1} parent=5 // pred_check_branch
        %199 = sbr.rel (%p197) target = $region28
      $region27: #{tpu_custom_call.1} parent=5 // pred_region
        // Predicated region
        $region29: #{tpu_custom_call.1} parent=27 // pred_check
          %p200 = pneg %p118
        $region30: #{tpu_custom_call.1} parent=27 // pred_check_branch
          %202 = sbr.rel (%p200) target = $region32
        $region31: #{tpu_custom_call.1} parent=27 // pred_region
          %s203 = sand.u32 %s108, 1
          %s204 = scalar_lea.sflag [#allocation3], %s203
          %s205 = sand.u32 %s108, 1
          %s206 = smul.addr %s205, 8
          %s207 = scalar_lea.vmem [#allocation8], %s206
          %s209 = ssub.s32 128, 128
          %210 = vsyncadd %s204, %s209
          %s211 = smul.addr %s25, 128
          %s212 = scalar_lea.hbm %s3, %s211
          %s214 = sshll.u32 %s207, 4
          %s215 = int_to_ptr.vmem [resolvable:$true] %s214
          %217 = dma.hbm_to_vmem [thread:$0]  %s212, 128, %s215, %s204
        $region32: #{tpu_custom_call.1} parent=27 // pred_fallthru
          _
      $region28: #{tpu_custom_call.1} parent=5 // pred_fallthru
        _
      %p218 = scmp.le.s32.totalorder 1, %s18
      %p219 = scmp.lt.s32.totalorder %s18, 5
      %p220 = pnand %p218, %p219
      %p221 = pneg %p220
      // Predicated region
      $region33: #{tpu_custom_call.1} parent=5 // pred_check
        _
      $region34: #{tpu_custom_call.1} parent=5 // pred_check_branch
        %223 = sbr.rel (%p220) target = $region36
      $region35: #{tpu_custom_call.1} parent=5 // pred_region
        %s224 = ssub.s32 %s18, 1
        // Predicated region
        $region37: #{tpu_custom_call.1} parent=35 // pred_check
          %p225 = pneg %p77
        $region38: #{tpu_custom_call.1} parent=35 // pred_check_branch
          %227 = sbr.rel (%p225) target = $region40
        $region39: #{tpu_custom_call.1} parent=35 // pred_region
          %228 = dma.done [#allocation5], 64
        $region40: #{tpu_custom_call.1} parent=35 // pred_fallthru
          _
        // Predicated region
        $region41: #{tpu_custom_call.1} parent=35 // pred_check
          %p229 = pneg %p98
        $region42: #{tpu_custom_call.1} parent=35 // pred_check_branch
          %231 = sbr.rel (%p229) target = $region44
        $region43: #{tpu_custom_call.1} parent=35 // pred_region
          %232 = dma.done [#allocation7], 64
        $region44: #{tpu_custom_call.1} parent=35 // pred_fallthru
          _
        %s233 = sand.u32 %s111, 1
        %s234 = scalar_lea.sflag [#allocation3], %s233
        %s235 = sand.u32 %s111, 1
        %s236 = smul.addr %s235, 8
        %s237 = scalar_lea.vmem [#allocation8], %s236
        // Predicated region
        $region45: #{tpu_custom_call.1} parent=35 // pred_check
          %p238 = pneg %p124
        $region46: #{tpu_custom_call.1} parent=35 // pred_check_branch
          %240 = sbr.rel (%p238) target = $region48
        $region47: #{tpu_custom_call.1} parent=35 // pred_region
          %241 = dma.done %s234, 128
        $region48: #{tpu_custom_call.1} parent=35 // pred_fallthru
          _
        %242 = sfence
        %p243 = scmp.lt.s32.totalorder %s28, 0
        %s244 = scalar_select %p243, %s28, 0
        %s245 = smul.addr %s244, 8
        %s246 = scalar_lea.vmem %s0, %s245
        %p247 = pneg %p56
        %p248 = pneg %p53
        %p249 = pneg %p77
        %p250 = pneg %p74
        %p251 = pneg %p98
        %p252 = pneg %p95
        %s253 = sand.u32 %s111, 1
        %s254 = scalar_lea.sflag [#allocation3], %s253
        %s255 = sand.u32 %s111, 1
        %s256 = smul.addr %s255, 8
        %s257 = scalar_lea.vmem [#allocation8], %s256
        %p258 = pneg %p124
        %p259 = pneg %p121
        %p260 = pneg %p152
        %p261 = pneg %p149
        %s262 = sand.u32 %s139, 1
        %s263 = scalar_lea.sflag [#allocation4], %s262
        %s264 = sand.u32 %s139, 1
        %s265 = smul.addr %s264, 104
        %s266 = scalar_lea.vmem [#allocation9], %s265
        %p267 = scmp.lt.s32.totalorder %s28, 0
        %s268 = scalar_select %p267, %s28, 0
        %s269 = smul.addr %s268, 8
        %s270 = scalar_lea.vmem %s0, %s269
        %v271 = vld [vmem:[%s270] sm:$0xff]
        %s272 = smul.u32 %s27, 128
        %s273 = sld [smem:[#allocation2 + %s272]]
        %s274 = sadd.s32 %s272, 1
        %s275 = sld [smem:[#allocation2 + %s274]]
        %s276 = sadd.s32 %s272, 2
        %s277 = sld [smem:[#allocation2 + %s276]]
        %s278 = sld [smem:[#allocation6 + %s272]]
        %v279 = vld [vmem:[%s237] sm:$0xff]
        %v280 = vlaneseq
        %v281 = vand.u32 %v280, 127
        %v282 = vcvt.s32.f32 %v281
        %v283 = vadd.f32 %v282, 1.0
        %vm284 = vcmask 154624
        %285 = vst.msk [vmem:[%s266] sm:$0xff] %vm284, %v283
        %v286 = vlaneseq
        %v287 = vshrl.u32 %v286, 7
        %v288 = vadd.s32 %v287, 8
        %v289 = vadd.s32 %v287, 16
        %v290 = vadd.s32 %v287, 24
        %v291 = vadd.s32 %v287, 32
        %v292 = vadd.s32 %v287, 40
        %v293 = vadd.s32 %v287, 48
        %v294 = vadd.s32 %v287, 56
        %v295 = vadd.s32 %v287, 64
        %v296 = vadd.s32 %v287, 72
        %v297 = vadd.s32 %v287, 80
        %v298 = vadd.s32 %v287, 88
        %v299 = vadd.s32 %v287, 96
        %v300 = vadd.s32 %v287, 104
        %v301 = vadd.s32 %v287, 112
        %v302 = vadd.s32 %v287, 120
        %vm303 = vcmp.le.s32.totalorder %v287, %v281
        %vm304 = vcmp.le.s32.totalorder %v288, %v281
        %vm305 = vcmp.le.s32.totalorder %v289, %v281
        %vm306 = vcmp.le.s32.totalorder %v290, %v281
        %vm307 = vcmp.le.s32.totalorder %v291, %v281
        %vm308 = vcmp.le.s32.totalorder %v292, %v281
        %vm309 = vcmp.le.s32.totalorder %v293, %v281
        %vm310 = vcmp.le.s32.totalorder %v294, %v281
        %vm311 = vcmp.le.s32.totalorder %v295, %v281
        %vm312 = vcmp.le.s32.totalorder %v296, %v281
        %vm313 = vcmp.le.s32.totalorder %v297, %v281
        %vm314 = vcmp.le.s32.totalorder %v298, %v281
        %vm315 = vcmp.le.s32.totalorder %v299, %v281
        %vm316 = vcmp.le.s32.totalorder %v300, %v281
        %vm317 = vcmp.le.s32.totalorder %v301, %v281
        %vm318 = vcmp.le.s32.totalorder %v302, %v281
        %v319 = vsel %vm303, 1, 0
        %v320 = vsel %vm304, 1, 0
        %v321 = vsel %vm305, 1, 0
        %v322 = vsel %vm306, 1, 0
        %v323 = vsel %vm307, 1, 0
        %v324 = vsel %vm308, 1, 0
        %v325 = vsel %vm309, 1, 0
        %v326 = vsel %vm310, 1, 0
        %v327 = vsel %vm311, 1, 0
        %v328 = vsel %vm312, 1, 0
        %v329 = vsel %vm313, 1, 0
        %v330 = vsel %vm314, 1, 0
        %v331 = vsel %vm315, 1, 0
        %v332 = vsel %vm316, 1, 0
        %v333 = vsel %vm317, 1, 0
        %v334 = vsel %vm318, 1, 0
        %v335 = vcvt.s32.f32 %v319
        %v336 = vcvt.s32.f32 %v320
        %v337 = vcvt.s32.f32 %v321
        %v338 = vcvt.s32.f32 %v322
        %v339 = vcvt.s32.f32 %v323
        %v340 = vcvt.s32.f32 %v324
        %v341 = vcvt.s32.f32 %v325
        %v342 = vcvt.s32.f32 %v326
        %v343 = vcvt.s32.f32 %v327
        %v344 = vcvt.s32.f32 %v328
        %v345 = vcvt.s32.f32 %v329
        %v346 = vcvt.s32.f32 %v330
        %v347 = vcvt.s32.f32 %v331
        %v348 = vcvt.s32.f32 %v332
        %v349 = vcvt.s32.f32 %v333
        %v350 = vcvt.s32.f32 %v334
        %v351 = vsub.s32 %v281, %v287
        %v352 = vsub.s32 %v281, %v288
        %v353 = vsub.s32 %v281, %v289
        %v354 = vsub.s32 %v281, %v290
        %v355 = vsub.s32 %v281, %v291
        %v356 = vsub.s32 %v281, %v292
        %v357 = vsub.s32 %v281, %v293
        %v358 = vsub.s32 %v281, %v294
        %v359 = vsub.s32 %v281, %v295
        %v360 = vsub.s32 %v281, %v296
        %v361 = vsub.s32 %v281, %v297
        %v362 = vsub.s32 %v281, %v298
        %v363 = vsub.s32 %v281, %v299
        %v364 = vsub.s32 %v281, %v300
        %v365 = vsub.s32 %v281, %v301
        %v366 = vsub.s32 %v281, %v302
        %v367 = vstv %s278
        %vm368 = vcmp.eq.s32.totalorder %v351, %v367
        %vm369 = vcmp.eq.s32.totalorder %v352, %v367
        %vm370 = vcmp.eq.s32.totalorder %v353, %v367
        %vm371 = vcmp.eq.s32.totalorder %v354, %v367
        %vm372 = vcmp.eq.s32.totalorder %v355, %v367
        %vm373 = vcmp.eq.s32.totalorder %v356, %v367
        %vm374 = vcmp.eq.s32.totalorder %v357, %v367
        %vm375 = vcmp.eq.s32.totalorder %v358, %v367
        %vm376 = vcmp.eq.s32.totalorder %v359, %v367
        %vm377 = vcmp.eq.s32.totalorder %v360, %v367
        %vm378 = vcmp.eq.s32.totalorder %v361, %v367
        %vm379 = vcmp.eq.s32.totalorder %v362, %v367
        %vm380 = vcmp.eq.s32.totalorder %v363, %v367
        %vm381 = vcmp.eq.s32.totalorder %v364, %v367
        %vm382 = vcmp.eq.s32.totalorder %v365, %v367
        %vm383 = vcmp.eq.s32.totalorder %v366, %v367
        %v384 = vsel %vm368, 1, 0
        %v385 = vsel %vm369, 1, 0
        %v386 = vsel %vm370, 1, 0
        %v387 = vsel %vm371, 1, 0
        %v388 = vsel %vm372, 1, 0
        %v389 = vsel %vm373, 1, 0
        %v390 = vsel %vm374, 1, 0
        %v391 = vsel %vm375, 1, 0
        %v392 = vsel %vm376, 1, 0
        %v393 = vsel %vm377, 1, 0
        %v394 = vsel %vm378, 1, 0
        %v395 = vsel %vm379, 1, 0
        %v396 = vsel %vm380, 1, 0
        %v397 = vsel %vm381, 1, 0
        %v398 = vsel %vm382, 1, 0
        %v399 = vsel %vm383, 1, 0
        %v400 = vcvt.s32.f32 %v384
        %v401 = vcvt.s32.f32 %v385
        %v402 = vcvt.s32.f32 %v386
        %v403 = vcvt.s32.f32 %v387
        %v404 = vcvt.s32.f32 %v388
        %v405 = vcvt.s32.f32 %v389
        %v406 = vcvt.s32.f32 %v390
        %v407 = vcvt.s32.f32 %v391
        %v408 = vcvt.s32.f32 %v392
        %v409 = vcvt.s32.f32 %v393
        %v410 = vcvt.s32.f32 %v394
        %v411 = vcvt.s32.f32 %v395
        %v412 = vcvt.s32.f32 %v396
        %v413 = vcvt.s32.f32 %v397
        %v414 = vcvt.s32.f32 %v398
        %v415 = vcvt.s32.f32 %v399
        %v416 = vrcp.pop 12.0
        %v417 = vmul.f32 %v271, %v416
        %v418 = vadd.f32 %v417, 1.0
        %v419 = vlog2.pop %v418
        %v420 = vmul.f32 %v419, 0.6931472
        %v421 = vsub.f32 0.0, %v271
        %423 = vrot.lane.b32.xlu0 %v420, 1
        %v424 = vpop.permute.xlu0 %423
        %v426 = vmul.f32 %v421, %v424
        %v427 = vmul.f32 %v426, 1.442695
        %v428 = vpow.pop %v427
        %v429 = vsub.f32 1.0, %v428
        %v430 = vrcp.pop %v429
        %v431 = vmul.f32 1.0, %v430
        %433 = vrot.lane.b32.xlu0 %v431, 1
        %v434 = vpop.permute.xlu0 %433
        %v436 = vmul.f32 %v271, %v434
        %438 = vrot.lane.b32.xlu0 %v417, 2
        %v439 = vpop.permute.xlu0 %438
        %v441 = vmul.f32 %v436, %v439
        %443 = vset.pattern.permute.xlu0 1
        %444 = vperm.xlu0 %443, %v271
        %v445 = vpop.permute.xlu0 %444
        %v447 = vsub.f32 %v445, %v282
        %v448 = vsub.f32 0.0, %v447
        %449 = vset.pattern.permute.xlu0 0
        %450 = vperm.xlu0 %449, %v420
        %v451 = vpop.permute.xlu0 %450
        %v453 = vmul.f32 %v448, %v451
        %v454 = vmul.f32 %v453, 1.442695
        %v455 = vpow.pop %v454
        %vm456 = vcmp.le.f32.partialorder %v282, %v445
        %v457 = vsub.f32 1.0, %v455
        %459 = vset.pattern.permute.xlu0 2
        %460 = vperm.xlu0 %459, %v436
        %v461 = vpop.permute.xlu0 %460
        %v463 = vmul.f32 %v461, %v457
        %v464 = vsel %vm456, %v463, 0.0
        %vm465 = vcmp.le.f32.partialorder %v283, %v445
        %467 = vset.pattern.permute.xlu0 0
        %468 = vperm.xlu0 %467, %v418
        %v469 = vpop.permute.xlu0 %468
        %v471 = vmul.f32 %v455, %v469
        %v472 = vsub.f32 1.0, %v471
        %v473 = vmul.f32 %v461, %v472
        %v474 = vsel %vm465, %v473, 0.0
        %vm475 = vcmp.lt.f32.partialorder %v282, 16.0
        %476 = vset.pattern.permute.xlu0 0
        %477 = vperm.xlu0 %476, %v417
        %v478 = vpop.permute.xlu0 %477
        %v480 = vmul.f32 %v464, %v478
        %482 = vset.pattern.permute.xlu0 2
        %483 = vperm.xlu0 %482, %v441
        %v484 = vpop.permute.xlu0 %483
        %v486 = vsub.f32 %v484, %v480
        %v487 = vsel %vm475, 1, 0
        %vm488 = vcmp.eq.s32.totalorder %v487, 1
        %v489 = vsel %vm488, %v486, 0.0
        %vm490 = vcmp.gt.f32.partialorder %v464, 0.0
        %v491 = vsel %vm490, %v464, 1.0
        %v492 = vrcp.pop %v491
        %v493 = vmul.f32 %v489, %v492
        %v494 = vsel %vm490, %v493, 0.0
        %v495 = vstv %s273
        %v496 = vmul.f32 %v271, %v495
        %498 = vset.pattern.permute.xlu0 2
        %499 = vperm.xlu0 %498, %v496
        %v500 = vpop.permute.xlu0 %499
        %v502 = vlaneseq
        %v503 = vshrl.u32 %v502, 7
        %v504 = vsub.s32 4, %v503
        %v505 = vrot.slane %v279, %v504
        %v506 = vmul.f32 %v500, %v505
        %v507 = vmul.f32 %v494, %v506
        %v508 = vlaneseq
        %v509 = vshrl.u32 %v508, 7
        %v510 = vsub.s32 5, %v509
        %v511 = vrot.slane %v279, %v510
        %v512 = vmul.f32 %v464, %v511
        %v513 = vadd.f32 %v512, 1e-12
        %v514 = vrcp.pop %v513
        %v515 = vmul.f32 %v506, %v514
        %516 = vmatprep.subr.mxu0 0.0
        %v517 = vand.u32 %v335, 4294901760
        %518 = vmatpush1.msra.mxu0 %v517
        %519 = vmatprep.subr.mxu0 0.0
        %v520 = vand.u32 %v336, 4294901760
        %521 = vmatpush1.msra.mxu0 %v520
        %522 = vmatprep.subr.mxu0 0.0
        %v523 = vand.u32 %v337, 4294901760
        %524 = vmatpush1.msra.mxu0 %v523
        %525 = vmatprep.subr.mxu0 0.0
        %v526 = vand.u32 %v338, 4294901760
        %527 = vmatpush1.msra.mxu0 %v526
        %528 = vmatprep.subr.mxu0 0.0
        %v529 = vand.u32 %v339, 4294901760
        %530 = vmatpush1.msra.mxu0 %v529
        %531 = vmatprep.subr.mxu0 0.0
        %v532 = vand.u32 %v340, 4294901760
        %533 = vmatpush1.msra.mxu0 %v532
        %534 = vmatprep.subr.mxu0 0.0
        %v535 = vand.u32 %v341, 4294901760
        %536 = vmatpush1.msra.mxu0 %v535
        %537 = vmatprep.subr.mxu0 0.0
        %v538 = vand.u32 %v342, 4294901760
        %539 = vmatpush1.msra.mxu0 %v538
        %540 = vmatprep.subr.mxu0 0.0
        %v541 = vand.u32 %v343, 4294901760
        %542 = vmatpush1.msra.mxu0 %v541
        %543 = vmatprep.subr.mxu0 0.0
        %v544 = vand.u32 %v344, 4294901760
        %545 = vmatpush1.msra.mxu0 %v544
        %546 = vmatprep.subr.mxu0 0.0
        %v547 = vand.u32 %v345, 4294901760
        %548 = vmatpush1.msra.mxu0 %v547
        %549 = vmatprep.subr.mxu0 0.0
        %v550 = vand.u32 %v346, 4294901760
        %551 = vmatpush1.msra.mxu0 %v550
        %552 = vmatprep.subr.mxu0 0.0
        %v553 = vand.u32 %v347, 4294901760
        %554 = vmatpush1.msra.mxu0 %v553
        %555 = vmatprep.subr.mxu0 0.0
        %v556 = vand.u32 %v348, 4294901760
        %557 = vmatpush1.msra.mxu0 %v556
        %558 = vmatprep.subr.mxu0 0.0
        %v559 = vand.u32 %v349, 4294901760
        %560 = vmatpush1.msra.mxu0 %v559
        %561 = vmatprep.subr.mxu0 0.0
        %v562 = vand.u32 %v350, 4294901760
        %563 = vmatpush1.msra.mxu0 %v562
        %564 = vmatprep.subr.mxu0 0.0
        %565 = vmatpush1.msra.mxu0 0.0
        %566 = vmatprep.subr.mxu0 0.0
        %567 = vmatpush1.msra.mxu0 0.0
        %568 = vmatprep.subr.mxu0 0.0
        %569 = vmatpush1.msra.mxu0 0.0
        %570 = vmatprep.subr.mxu0 0.0
        %571 = vmatpush1.msra.mxu0 0.0
        %572 = vmatprep.subr.mxu0 0.0
        %573 = vmatpush1.msra.mxu0 0.0
        %574 = vmatprep.subr.mxu0 0.0
        %575 = vmatpush1.msra.mxu0 0.0
        %576 = vmatprep.subr.mxu0 0.0
        %577 = vmatpush1.msra.mxu0 0.0
        %578 = vmatprep.subr.mxu0 0.0
        %579 = vmatpush1.msra.mxu0 0.0
        %580 = vmatprep.subr.mxu0 0.0
        %581 = vmatpush1.msra.mxu0 0.0
        %582 = vmatprep.subr.mxu0 0.0
        %583 = vmatpush1.msra.mxu0 0.0
        %584 = vmatprep.subr.mxu0 0.0
        %585 = vmatpush1.msra.mxu0 0.0
        %586 = vmatprep.subr.mxu0 0.0
        %587 = vmatpush1.msra.mxu0 0.0
        %588 = vmatprep.subr.mxu0 0.0
        %589 = vmatpush1.msra.mxu0 0.0
        %590 = vmatprep.subr.mxu0 0.0
        %591 = vmatpush1.msra.mxu0 0.0
        %592 = vmatprep.subr.mxu0 0.0
        %593 = vmatpush1.msra.mxu0 0.0
        %594 = vmatprep.subr.mxu0 0.0
        %595 = vmatpush1.msra.mxu0 0.0
        %596 = vmatprep.mubr.f32.mxu0 0.0
        %v597 = vand.u32 %v515, 4294901760
        %v598 = vsub.f32 %v515, %v597
        %v599 = vand.u32 %v598, 4294901760
        %v600 = vsub.f32 %v598, %v599
        %v601 = vand.u32 %v600, 4294901760
        %602 = vmatmul.mubr.f32.gmra.mrb[0].mxu0 %v601
        %v603 = vpop.f32.mrb[0].mxu0
        %v604 = vadd.f32 0.0, %v603
        %v605 = vpop.f32.mrb[0].mxu0
        %606 = vdwg.mxu0
        %607 = vmatprep.subr.mxu0 0.0
        %v608 = vand.u32 %v335, 4294901760
        %v609 = vsub.f32 %v335, %v608
        %v610 = vand.u32 %v609, 4294901760
        %v611 = vsub.f32 %v609, %v610
        %v612 = vand.u32 %v611, 4294901760
        %613 = vmatpush1.msra.mxu0 %v612
        %614 = vmatprep.subr.mxu0 0.0
        %v615 = vand.u32 %v336, 4294901760
        %v616 = vsub.f32 %v336, %v615
        %v617 = vand.u32 %v616, 4294901760
        %v618 = vsub.f32 %v616, %v617
        %v619 = vand.u32 %v618, 4294901760
        %620 = vmatpush1.msra.mxu0 %v619
        %621 = vmatprep.subr.mxu0 0.0
        %v622 = vand.u32 %v337, 4294901760
        %v623 = vsub.f32 %v337, %v622
        %v624 = vand.u32 %v623, 4294901760
        %v625 = vsub.f32 %v623, %v624
        %v626 = vand.u32 %v625, 4294901760
        %627 = vmatpush1.msra.mxu0 %v626
        %628 = vmatprep.subr.mxu0 0.0
        %v629 = vand.u32 %v338, 4294901760
        %v630 = vsub.f32 %v338, %v629
        %v631 = vand.u32 %v630, 4294901760
        %v632 = vsub.f32 %v630, %v631
        %v633 = vand.u32 %v632, 4294901760
        %634 = vmatpush1.msra.mxu0 %v633
        %635 = vmatprep.subr.mxu0 0.0
        %v636 = vand.u32 %v339, 4294901760
        %v637 = vsub.f32 %v339, %v636
        %v638 = vand.u32 %v637, 4294901760
        %v639 = vsub.f32 %v637, %v638
        %v640 = vand.u32 %v639, 4294901760
        %641 = vmatpush1.msra.mxu0 %v640
        %642 = vmatprep.subr.mxu0 0.0
        %v643 = vand.u32 %v340, 4294901760
        %v644 = vsub.f32 %v340, %v643
        %v645 = vand.u32 %v644, 4294901760
        %v646 = vsub.f32 %v644, %v645
        %v647 = vand.u32 %v646, 4294901760
        %648 = vmatpush1.msra.mxu0 %v647
        %649 = vmatprep.subr.mxu0 0.0
        %v650 = vand.u32 %v341, 4294901760
        %v651 = vsub.f32 %v341, %v650
        %v652 = vand.u32 %v651, 4294901760
        %v653 = vsub.f32 %v651, %v652
        %v654 = vand.u32 %v653, 4294901760
        %655 = vmatpush1.msra.mxu0 %v654
        %656 = vmatprep.subr.mxu0 0.0
        %v657 = vand.u32 %v342, 4294901760
        %v658 = vsub.f32 %v342, %v657
        %v659 = vand.u32 %v658, 4294901760
        %v660 = vsub.f32 %v658, %v659
        %v661 = vand.u32 %v660, 4294901760
        %662 = vmatpush1.msra.mxu0 %v661
        %663 = vmatprep.subr.mxu0 0.0
        %v664 = vand.u32 %v343, 4294901760
        %v665 = vsub.f32 %v343, %v664
        %v666 = vand.u32 %v665, 4294901760
        %v667 = vsub.f32 %v665, %v666
        %v668 = vand.u32 %v667, 4294901760
        %669 = vmatpush1.msra.mxu0 %v668
        %670 = vmatprep.subr.mxu0 0.0
        %v671 = vand.u32 %v344, 4294901760
        %v672 = vsub.f32 %v344, %v671
        %v673 = vand.u32 %v672, 4294901760
        %v674 = vsub.f32 %v672, %v673
        %v675 = vand.u32 %v674, 4294901760
        %676 = vmatpush1.msra.mxu0 %v675
        %677 = vmatprep.subr.mxu0 0.0
        %v678 = vand.u32 %v345, 4294901760
        %v679 = vsub.f32 %v345, %v678
        %v680 = vand.u32 %v679, 4294901760
        %v681 = vsub.f32 %v679, %v680
        %v682 = vand.u32 %v681, 4294901760
        %683 = vmatpush1.msra.mxu0 %v682
        %684 = vmatprep.subr.mxu0 0.0
        %v685 = vand.u32 %v346, 4294901760
        %v686 = vsub.f32 %v346, %v685
        %v687 = vand.u32 %v686, 4294901760
        %v688 = vsub.f32 %v686, %v687
        %v689 = vand.u32 %v688, 4294901760
        %690 = vmatpush1.msra.mxu0 %v689
        %691 = vmatprep.subr.mxu0 0.0
        %v692 = vand.u32 %v347, 4294901760
        %v693 = vsub.f32 %v347, %v692
        %v694 = vand.u32 %v693, 4294901760
        %v695 = vsub.f32 %v693, %v694
        %v696 = vand.u32 %v695, 4294901760
        %697 = vmatpush1.msra.mxu0 %v696
        %698 = vmatprep.subr.mxu0 0.0
        %v699 = vand.u32 %v348, 4294901760
        %v700 = vsub.f32 %v348, %v699
        %v701 = vand.u32 %v700, 4294901760
        %v702 = vsub.f32 %v700, %v701
        %v703 = vand.u32 %v702, 4294901760
        %704 = vmatpush1.msra.mxu0 %v703
        %705 = vmatprep.subr.mxu0 0.0
        %v706 = vand.u32 %v349, 4294901760
        %v707 = vsub.f32 %v349, %v706
        %v708 = vand.u32 %v707, 4294901760
        %v709 = vsub.f32 %v707, %v708
        %v710 = vand.u32 %v709, 4294901760
        %711 = vmatpush1.msra.mxu0 %v710
        %712 = vmatprep.subr.mxu0 0.0
        %v713 = vand.u32 %v350, 4294901760
        %v714 = vsub.f32 %v350, %v713
        %v715 = vand.u32 %v714, 4294901760
        %v716 = vsub.f32 %v714, %v715
        %v717 = vand.u32 %v716, 4294901760
        %718 = vmatpush1.msra.mxu0 %v717
        %719 = vmatprep.subr.mxu0 0.0
        %720 = vmatpush1.msra.mxu0 0.0
        %721 = vmatprep.subr.mxu0 0.0
        %722 = vmatpush1.msra.mxu0 0.0
        %723 = vmatprep.subr.mxu0 0.0
        %724 = vmatpush1.msra.mxu0 0.0
        %725 = vmatprep.subr.mxu0 0.0
        %726 = vmatpush1.msra.mxu0 0.0
        %727 = vmatprep.subr.mxu0 0.0
        %728 = vmatpush1.msra.mxu0 0.0
        %729 = vmatprep.subr.mxu0 0.0
        %730 = vmatpush1.msra.mxu0 0.0
        %731 = vmatprep.subr.mxu0 0.0
        %732 = vmatpush1.msra.mxu0 0.0
        %733 = vmatprep.subr.mxu0 0.0
        %734 = vmatpush1.msra.mxu0 0.0
        %735 = vmatprep.subr.mxu0 0.0
        %736 = vmatpush1.msra.mxu0 0.0
        %737 = vmatprep.subr.mxu0 0.0
        %738 = vmatpush1.msra.mxu0 0.0
        %739 = vmatprep.subr.mxu0 0.0
        %740 = vmatpush1.msra.mxu0 0.0
        %741 = vmatprep.subr.mxu0 0.0
        %742 = vmatpush1.msra.mxu0 0.0
        %743 = vmatprep.subr.mxu0 0.0
        %744 = vmatpush1.msra.mxu0 0.0
        %745 = vmatprep.subr.mxu0 0.0
        %746 = vmatpush1.msra.mxu0 0.0
        %747 = vmatprep.subr.mxu0 0.0
        %748 = vmatpush1.msra.mxu0 0.0
        %749 = vmatprep.subr.mxu0 0.0
        %750 = vmatpush1.msra.mxu0 0.0
        %751 = vmatprep.mubr.f32.mxu0 0.0
        %v752 = vand.u32 %v515, 4294901760
        %753 = vmatmul.mubr.f32.gmra.mrb[0].mxu0 %v752
        %v754 = vpop.f32.mrb[0].mxu0
        %v755 = vadd.f32 %v604, %v754
        %v756 = vpop.f32.mrb[0].mxu0
        %757 = vdwg.mxu0
        %758 = vmatprep.subr.mxu0 0.0
        %v759 = vand.u32 %v335, 4294901760
        %v760 = vsub.f32 %v335, %v759
        %761 = vmatpush1.msra.mxu0 %v760
        %762 = vmatprep.subr.mxu0 0.0
        %v763 = vand.u32 %v336, 4294901760
        %v764 = vsub.f32 %v336, %v763
        %765 = vmatpush1.msra.mxu0 %v764
        %766 = vmatprep.subr.mxu0 0.0
        %v767 = vand.u32 %v337, 4294901760
        %v768 = vsub.f32 %v337, %v767
        %769 = vmatpush1.msra.mxu0 %v768
        %770 = vmatprep.subr.mxu0 0.0
        %v771 = vand.u32 %v338, 4294901760
        %v772 = vsub.f32 %v338, %v771
        %773 = vmatpush1.msra.mxu0 %v772
        %774 = vmatprep.subr.mxu0 0.0
        %v775 = vand.u32 %v339, 4294901760
        %v776 = vsub.f32 %v339, %v775
        %777 = vmatpush1.msra.mxu0 %v776
        %778 = vmatprep.subr.mxu0 0.0
        %v779 = vand.u32 %v340, 4294901760
        %v780 = vsub.f32 %v340, %v779
        %781 = vmatpush1.msra.mxu0 %v780
        %782 = vmatprep.subr.mxu0 0.0
        %v783 = vand.u32 %v341, 4294901760
        %v784 = vsub.f32 %v341, %v783
        %785 = vmatpush1.msra.mxu0 %v784
        %786 = vmatprep.subr.mxu0 0.0
        %v787 = vand.u32 %v342, 4294901760
        %v788 = vsub.f32 %v342, %v787
        %789 = vmatpush1.msra.mxu0 %v788
        %790 = vmatprep.subr.mxu0 0.0
        %v791 = vand.u32 %v343, 4294901760
        %v792 = vsub.f32 %v343, %v791
        %793 = vmatpush1.msra.mxu0 %v792
        %794 = vmatprep.subr.mxu0 0.0
        %v795 = vand.u32 %v344, 4294901760
        %v796 = vsub.f32 %v344, %v795
        %797 = vmatpush1.msra.mxu0 %v796
        %798 = vmatprep.subr.mxu0 0.0
        %v799 = vand.u32 %v345, 4294901760
        %v800 = vsub.f32 %v345, %v799
        %801 = vmatpush1.msra.mxu0 %v800
        %802 = vmatprep.subr.mxu0 0.0
        %v803 = vand.u32 %v346, 4294901760
        %v804 = vsub.f32 %v346, %v803
        %805 = vmatpush1.msra.mxu0 %v804
        %806 = vmatprep.subr.mxu0 0.0
        %v807 = vand.u32 %v347, 4294901760
        %v808 = vsub.f32 %v347, %v807
        %809 = vmatpush1.msra.mxu0 %v808
        %810 = vmatprep.subr.mxu0 0.0
        %v811 = vand.u32 %v348, 4294901760
        %v812 = vsub.f32 %v348, %v811
        %813 = vmatpush1.msra.mxu0 %v812
        %814 = vmatprep.subr.mxu0 0.0
        %v815 = vand.u32 %v349, 4294901760
        %v816 = vsub.f32 %v349, %v815
        %817 = vmatpush1.msra.mxu0 %v816
        %818 = vmatprep.subr.mxu0 0.0
        %v819 = vand.u32 %v350, 4294901760
        %v820 = vsub.f32 %v350, %v819
        %821 = vmatpush1.msra.mxu0 %v820
        %822 = vmatprep.subr.mxu0 0.0
        %823 = vmatpush1.msra.mxu0 0.0
        %824 = vmatprep.subr.mxu0 0.0
        %825 = vmatpush1.msra.mxu0 0.0
        %826 = vmatprep.subr.mxu0 0.0
        %827 = vmatpush1.msra.mxu0 0.0
        %828 = vmatprep.subr.mxu0 0.0
        %829 = vmatpush1.msra.mxu0 0.0
        %830 = vmatprep.subr.mxu0 0.0
        %831 = vmatpush1.msra.mxu0 0.0
        %832 = vmatprep.subr.mxu0 0.0
        %833 = vmatpush1.msra.mxu0 0.0
        %834 = vmatprep.subr.mxu0 0.0
        %835 = vmatpush1.msra.mxu0 0.0
        %836 = vmatprep.subr.mxu0 0.0
        %837 = vmatpush1.msra.mxu0 0.0
        %838 = vmatprep.subr.mxu0 0.0
        %839 = vmatpush1.msra.mxu0 0.0
        %840 = vmatprep.subr.mxu0 0.0
        %841 = vmatpush1.msra.mxu0 0.0
        %842 = vmatprep.subr.mxu0 0.0
        %843 = vmatpush1.msra.mxu0 0.0
        %844 = vmatprep.subr.mxu0 0.0
        %845 = vmatpush1.msra.mxu0 0.0
        %846 = vmatprep.subr.mxu0 0.0
        %847 = vmatpush1.msra.mxu0 0.0
        %848 = vmatprep.subr.mxu0 0.0
        %849 = vmatpush1.msra.mxu0 0.0
        %850 = vmatprep.subr.mxu0 0.0
        %851 = vmatpush1.msra.mxu0 0.0
        %852 = vmatprep.subr.mxu0 0.0
        %853 = vmatpush1.msra.mxu0 0.0
        %854 = vmatprep.mubr.f32.mxu0 0.0
        %v855 = vand.u32 %v515, 4294901760
        %v856 = vsub.f32 %v515, %v855
        %857 = vmatmul.mubr.f32.gmra.mrb[0].mxu0 %v856
        %v858 = vpop.f32.mrb[0].mxu0
        %v859 = vadd.f32 %v755, %v858
        %v860 = vpop.f32.mrb[0].mxu0
        %861 = vdwg.mxu0
        %862 = vmatprep.subr.mxu0 0.0
        %v863 = vand.u32 %v335, 4294901760
        %864 = vmatpush1.msra.mxu0 %v863
        %865 = vmatprep.subr.mxu0 0.0
        %v866 = vand.u32 %v336, 4294901760
        %867 = vmatpush1.msra.mxu0 %v866
        %868 = vmatprep.subr.mxu0 0.0
        %v869 = vand.u32 %v337, 4294901760
        %870 = vmatpush1.msra.mxu0 %v869
        %871 = vmatprep.subr.mxu0 0.0
        %v872 = vand.u32 %v338, 4294901760
        %873 = vmatpush1.msra.mxu0 %v872
        %874 = vmatprep.subr.mxu0 0.0
        %v875 = vand.u32 %v339, 4294901760
        %876 = vmatpush1.msra.mxu0 %v875
        %877 = vmatprep.subr.mxu0 0.0
        %v878 = vand.u32 %v340, 4294901760
        %879 = vmatpush1.msra.mxu0 %v878
        %880 = vmatprep.subr.mxu0 0.0
        %v881 = vand.u32 %v341, 4294901760
        %882 = vmatpush1.msra.mxu0 %v881
        %883 = vmatprep.subr.mxu0 0.0
        %v884 = vand.u32 %v342, 4294901760
        %885 = vmatpush1.msra.mxu0 %v884
        %886 = vmatprep.subr.mxu0 0.0
        %v887 = vand.u32 %v343, 4294901760
        %888 = vmatpush1.msra.mxu0 %v887
        %889 = vmatprep.subr.mxu0 0.0
        %v890 = vand.u32 %v344, 4294901760
        %891 = vmatpush1.msra.mxu0 %v890
        %892 = vmatprep.subr.mxu0 0.0
        %v893 = vand.u32 %v345, 4294901760
        %894 = vmatpush1.msra.mxu0 %v893
        %895 = vmatprep.subr.mxu0 0.0
        %v896 = vand.u32 %v346, 4294901760
        %897 = vmatpush1.msra.mxu0 %v896
        %898 = vmatprep.subr.mxu0 0.0
        %v899 = vand.u32 %v347, 4294901760
        %900 = vmatpush1.msra.mxu0 %v899
        %901 = vmatprep.subr.mxu0 0.0
        %v902 = vand.u32 %v348, 4294901760
        %903 = vmatpush1.msra.mxu0 %v902
        %904 = vmatprep.subr.mxu0 0.0
        %v905 = vand.u32 %v349, 4294901760
        %906 = vmatpush1.msra.mxu0 %v905
        %907 = vmatprep.subr.mxu0 0.0
        %v908 = vand.u32 %v350, 4294901760
        %909 = vmatpush1.msra.mxu0 %v908
        %910 = vmatprep.subr.mxu0 0.0
        %911 = vmatpush1.msra.mxu0 0.0
        %912 = vmatprep.subr.mxu0 0.0
        %913 = vmatpush1.msra.mxu0 0.0
        %914 = vmatprep.subr.mxu0 0.0
        %915 = vmatpush1.msra.mxu0 0.0
        %916 = vmatprep.subr.mxu0 0.0
        %917 = vmatpush1.msra.mxu0 0.0
        %918 = vmatprep.subr.mxu0 0.0
        %919 = vmatpush1.msra.mxu0 0.0
        %920 = vmatprep.subr.mxu0 0.0
        %921 = vmatpush1.msra.mxu0 0.0
        %922 = vmatprep.subr.mxu0 0.0
        %923 = vmatpush1.msra.mxu0 0.0
        %924 = vmatprep.subr.mxu0 0.0
        %925 = vmatpush1.msra.mxu0 0.0
        %926 = vmatprep.subr.mxu0 0.0
        %927 = vmatpush1.msra.mxu0 0.0
        %928 = vmatprep.subr.mxu0 0.0
        %929 = vmatpush1.msra.mxu0 0.0
        %930 = vmatprep.subr.mxu0 0.0
        %931 = vmatpush1.msra.mxu0 0.0
        %932 = vmatprep.subr.mxu0 0.0
        %933 = vmatpush1.msra.mxu0 0.0
        %934 = vmatprep.subr.mxu0 0.0
        %935 = vmatpush1.msra.mxu0 0.0
        %936 = vmatprep.subr.mxu0 0.0
        %937 = vmatpush1.msra.mxu0 0.0
        %938 = vmatprep.subr.mxu0 0.0
        %939 = vmatpush1.msra.mxu0 0.0
        %940 = vmatprep.subr.mxu0 0.0
        %941 = vmatpush1.msra.mxu0 0.0
        %942 = vmatprep.mubr.f32.mxu0 0.0
        %v943 = vand.u32 %v515, 4294901760
        %v944 = vsub.f32 %v515, %v943
        %v945 = vand.u32 %v944, 4294901760
        %946 = vmatmul.mubr.f32.gmra.mrb[0].mxu0 %v945
        %v947 = vpop.f32.mrb[0].mxu0
        %v948 = vadd.f32 %v859, %v947
        %v949 = vpop.f32.mrb[0].mxu0
        %950 = vdwg.mxu0
        %951 = vmatprep.subr.mxu0 0.0
        %v952 = vand.u32 %v335, 4294901760
        %v953 = vsub.f32 %v335, %v952
        %v954 = vand.u32 %v953, 4294901760
        %955 = vmatpush1.msra.mxu0 %v954
        %956 = vmatprep.subr.mxu0 0.0
        %v957 = vand.u32 %v336, 4294901760
        %v958 = vsub.f32 %v336, %v957
        %v959 = vand.u32 %v958, 4294901760
        %960 = vmatpush1.msra.mxu0 %v959
        %961 = vmatprep.subr.mxu0 0.0
        %v962 = vand.u32 %v337, 4294901760
        %v963 = vsub.f32 %v337, %v962
        %v964 = vand.u32 %v963, 4294901760
        %965 = vmatpush1.msra.mxu0 %v964
        %966 = vmatprep.subr.mxu0 0.0
        %v967 = vand.u32 %v338, 4294901760
        %v968 = vsub.f32 %v338, %v967
        %v969 = vand.u32 %v968, 4294901760
        %970 = vmatpush1.msra.mxu0 %v969
        %971 = vmatprep.subr.mxu0 0.0
        %v972 = vand.u32 %v339, 4294901760
        %v973 = vsub.f32 %v339, %v972
        %v974 = vand.u32 %v973, 4294901760
        %975 = vmatpush1.msra.mxu0 %v974
        %976 = vmatprep.subr.mxu0 0.0
        %v977 = vand.u32 %v340, 4294901760
        %v978 = vsub.f32 %v340, %v977
        %v979 = vand.u32 %v978, 4294901760
        %980 = vmatpush1.msra.mxu0 %v979
        %981 = vmatprep.subr.mxu0 0.0
        %v982 = vand.u32 %v341, 4294901760
        %v983 = vsub.f32 %v341, %v982
        %v984 = vand.u32 %v983, 4294901760
        %985 = vmatpush1.msra.mxu0 %v984
        %986 = vmatprep.subr.mxu0 0.0
        %v987 = vand.u32 %v342, 4294901760
        %v988 = vsub.f32 %v342, %v987
        %v989 = vand.u32 %v988, 4294901760
        %990 = vmatpush1.msra.mxu0 %v989
        %991 = vmatprep.subr.mxu0 0.0
        %v992 = vand.u32 %v343, 4294901760
        %v993 = vsub.f32 %v343, %v992
        %v994 = vand.u32 %v993, 4294901760
        %995 = vmatpush1.msra.mxu0 %v994
        %996 = vmatprep.subr.mxu0 0.0
        %v997 = vand.u32 %v344, 4294901760
        %v998 = vsub.f32 %v344, %v997
        %v999 = vand.u32 %v998, 4294901760
        %1000 = vmatpush1.msra.mxu0 %v999
        %1001 = vmatprep.subr.mxu0 0.0
        %v1002 = vand.u32 %v345, 4294901760
        %v1003 = vsub.f32 %v345, %v1002
        %v1004 = vand.u32 %v1003, 4294901760
        %1005 = vmatpush1.msra.mxu0 %v1004
        %1006 = vmatprep.subr.mxu0 0.0
        %v1007 = vand.u32 %v346, 4294901760
        %v1008 = vsub.f32 %v346, %v1007
        %v1009 = vand.u32 %v1008, 4294901760
        %1010 = vmatpush1.msra.mxu0 %v1009
        %1011 = vmatprep.subr.mxu0 0.0
        %v1012 = vand.u32 %v347, 4294901760
        %v1013 = vsub.f32 %v347, %v1012
        %v1014 = vand.u32 %v1013, 4294901760
        %1015 = vmatpush1.msra.mxu0 %v1014
        %1016 = vmatprep.subr.mxu0 0.0
        %v1017 = vand.u32 %v348, 4294901760
        %v1018 = vsub.f32 %v348, %v1017
        %v1019 = vand.u32 %v1018, 4294901760
        %1020 = vmatpush1.msra.mxu0 %v1019
        %1021 = vmatprep.subr.mxu0 0.0
        %v1022 = vand.u32 %v349, 4294901760
        %v1023 = vsub.f32 %v349, %v1022
        %v1024 = vand.u32 %v1023, 4294901760
        %1025 = vmatpush1.msra.mxu0 %v1024
        %1026 = vmatprep.subr.mxu0 0.0
        %v1027 = vand.u32 %v350, 4294901760
        %v1028 = vsub.f32 %v350, %v1027
        %v1029 = vand.u32 %v1028, 4294901760
        %1030 = vmatpush1.msra.mxu0 %v1029
        %1031 = vmatprep.subr.mxu0 0.0
        %1032 = vmatpush1.msra.mxu0 0.0
        %1033 = vmatprep.subr.mxu0 0.0
        %1034 = vmatpush1.msra.mxu0 0.0
        %1035 = vmatprep.subr.mxu0 0.0
        %1036 = vmatpush1.msra.mxu0 0.0
        %1037 = vmatprep.subr.mxu0 0.0
        %1038 = vmatpush1.msra.mxu0 0.0
        %1039 = vmatprep.subr.mxu0 0.0
        %1040 = vmatpush1.msra.mxu0 0.0
        %1041 = vmatprep.subr.mxu0 0.0
        %1042 = vmatpush1.msra.mxu0 0.0
        %1043 = vmatprep.subr.mxu0 0.0
        %1044 = vmatpush1.msra.mxu0 0.0
        %1045 = vmatprep.subr.mxu0 0.0
        %1046 = vmatpush1.msra.mxu0 0.0
        %1047 = vmatprep.subr.mxu0 0.0
        %1048 = vmatpush1.msra.mxu0 0.0
        %1049 = vmatprep.subr.mxu0 0.0
        %1050 = vmatpush1.msra.mxu0 0.0
        %1051 = vmatprep.subr.mxu0 0.0
        %1052 = vmatpush1.msra.mxu0 0.0
        %1053 = vmatprep.subr.mxu0 0.0
        %1054 = vmatpush1.msra.mxu0 0.0
        %1055 = vmatprep.subr.mxu0 0.0
        %1056 = vmatpush1.msra.mxu0 0.0
        %1057 = vmatprep.subr.mxu0 0.0
        %1058 = vmatpush1.msra.mxu0 0.0
        %1059 = vmatprep.subr.mxu0 0.0
        %1060 = vmatpush1.msra.mxu0 0.0
        %1061 = vmatprep.subr.mxu0 0.0
        %1062 = vmatpush1.msra.mxu0 0.0
        %1063 = vmatprep.mubr.f32.mxu0 0.0
        %v1064 = vand.u32 %v515, 4294901760
        %1065 = vmatmul.mubr.f32.gmra.mrb[0].mxu0 %v1064
        %v1066 = vpop.f32.mrb[0].mxu0
        %v1067 = vadd.f32 %v948, %v1066
        %v1068 = vpop.f32.mrb[0].mxu0
        %1069 = vdwg.mxu0
        %1070 = vmatprep.subr.mxu0 0.0
        %v1071 = vand.u32 %v335, 4294901760
        %1072 = vmatpush1.msra.mxu0 %v1071
        %1073 = vmatprep.subr.mxu0 0.0
        %v1074 = vand.u32 %v336, 4294901760
        %1075 = vmatpush1.msra.mxu0 %v1074
        %1076 = vmatprep.subr.mxu0 0.0
        %v1077 = vand.u32 %v337, 4294901760
        %1078 = vmatpush1.msra.mxu0 %v1077
        %1079 = vmatprep.subr.mxu0 0.0
        %v1080 = vand.u32 %v338, 4294901760
        %1081 = vmatpush1.msra.mxu0 %v1080
        %1082 = vmatprep.subr.mxu0 0.0
        %v1083 = vand.u32 %v339, 4294901760
        %1084 = vmatpush1.msra.mxu0 %v1083
        %1085 = vmatprep.subr.mxu0 0.0
        %v1086 = vand.u32 %v340, 4294901760
        %1087 = vmatpush1.msra.mxu0 %v1086
        %1088 = vmatprep.subr.mxu0 0.0
        %v1089 = vand.u32 %v341, 4294901760
        %1090 = vmatpush1.msra.mxu0 %v1089
        %1091 = vmatprep.subr.mxu0 0.0
        %v1092 = vand.u32 %v342, 4294901760
        %1093 = vmatpush1.msra.mxu0 %v1092
        %1094 = vmatprep.subr.mxu0 0.0
        %v1095 = vand.u32 %v343, 4294901760
        %1096 = vmatpush1.msra.mxu0 %v1095
        %1097 = vmatprep.subr.mxu0 0.0
        %v1098 = vand.u32 %v344, 4294901760
        %1099 = vmatpush1.msra.mxu0 %v1098
        %1100 = vmatprep.subr.mxu0 0.0
        %v1101 = vand.u32 %v345, 4294901760
        %1102 = vmatpush1.msra.mxu0 %v1101
        %1103 = vmatprep.subr.mxu0 0.0
        %v1104 = vand.u32 %v346, 4294901760
        %1105 = vmatpush1.msra.mxu0 %v1104
        %1106 = vmatprep.subr.mxu0 0.0
        %v1107 = vand.u32 %v347, 4294901760
        %1108 = vmatpush1.msra.mxu0 %v1107
        %1109 = vmatprep.subr.mxu0 0.0
        %v1110 = vand.u32 %v348, 4294901760
        %1111 = vmatpush1.msra.mxu0 %v1110
        %1112 = vmatprep.subr.mxu0 0.0
        %v1113 = vand.u32 %v349, 4294901760
        %1114 = vmatpush1.msra.mxu0 %v1113
        %1115 = vmatprep.subr.mxu0 0.0
        %v1116 = vand.u32 %v350, 4294901760
        %1117 = vmatpush1.msra.mxu0 %v1116
        %1118 = vmatprep.subr.mxu0 0.0
        %1119 = vmatpush1.msra.mxu0 0.0
        %1120 = vmatprep.subr.mxu0 0.0
        %1121 = vmatpush1.msra.mxu0 0.0
        %1122 = vmatprep.subr.mxu0 0.0
        %1123 = vmatpush1.msra.mxu0 0.0
        %1124 = vmatprep.subr.mxu0 0.0
        %1125 = vmatpush1.msra.mxu0 0.0
        %1126 = vmatprep.subr.mxu0 0.0
        %1127 = vmatpush1.msra.mxu0 0.0
        %1128 = vmatprep.subr.mxu0 0.0
        %1129 = vmatpush1.msra.mxu0 0.0
        %1130 = vmatprep.subr.mxu0 0.0
        %1131 = vmatpush1.msra.mxu0 0.0
        %1132 = vmatprep.subr.mxu0 0.0
        %1133 = vmatpush1.msra.mxu0 0.0
        %1134 = vmatprep.subr.mxu0 0.0
        %1135 = vmatpush1.msra.mxu0 0.0
        %1136 = vmatprep.subr.mxu0 0.0
        %1137 = vmatpush1.msra.mxu0 0.0
        %1138 = vmatprep.subr.mxu0 0.0
        %1139 = vmatpush1.msra.mxu0 0.0
        %1140 = vmatprep.subr.mxu0 0.0
        %1141 = vmatpush1.msra.mxu0 0.0
        %1142 = vmatprep.subr.mxu0 0.0
        %1143 = vmatpush1.msra.mxu0 0.0
        %1144 = vmatprep.subr.mxu0 0.0
        %1145 = vmatpush1.msra.mxu0 0.0
        %1146 = vmatprep.subr.mxu0 0.0
        %1147 = vmatpush1.msra.mxu0 0.0
        %1148 = vmatprep.subr.mxu0 0.0
        %1149 = vmatpush1.msra.mxu0 0.0
        %1150 = vmatprep.mubr.f32.mxu0 0.0
        %v1151 = vand.u32 %v515, 4294901760
        %1152 = vmatmul.mubr.f32.gmra.mrb[0].mxu0 %v1151
        %v1153 = vpop.f32.mrb[0].mxu0
        %v1154 = vadd.f32 %v1067, %v1153
        %v1155 = vpop.f32.mrb[0].mxu0
        %1156 = vdwg.mxu0
        %v1157 = vsub.f32 1.0, %v1154
        %v1158 = vmul.f32 %v511, %v1157
        %vm1159 = vcmp.ge.s32.totalorder %v281, 1
        %1160 = vrot.lane.b32.xlu0 %v1158, 1
        %v1161 = vpop.permute.xlu0 %1160
        %v1162 = vsel %vm1159, 1, 0
        %vm1163 = vcmp.eq.s32.totalorder %v1162, 1
        %v1164 = vsel %vm1163, %v1161, 1.0
        %v1165 = vmul.f32 %v1164, %v464
        %s1166 = scalar_lea.vmem %s266, 80 [#allocation9]
        %1167 = vst.msk [vmem:[%s1166] sm:$0xff] %vm284, %v1165
        %v1168 = vmul.f32 %v1158, %v474
        %s1169 = scalar_lea.vmem %s266, 88 [#allocation9]
        %1170 = vst.msk [vmem:[%s1169] sm:$0xff] %vm284, %v1168
        %v1172 = vrot.slane %v279, 1
        %v1174 = vadd.f32 %v279, %v1172
        %v1175 = vmul.f32 %v1164, %v489
        %v1176 = vlaneseq
        %v1177 = vshrl.u32 %v1176, 7
        %v1178 = vsub.s32 1, %v1177
        %v1179 = vrot.slane %v1174, %v1178
        %v1180 = vmul.f32 %v1175, %v1179
        %v1181 = vadd.f32 %v1180, %v507
        %v1182 = vsub.f32 %v1175, %v1181
        %s1183 = scalar_lea.vmem %s266, 16 [#allocation9]
        %1184 = vst.msk [vmem:[%s1183] sm:$0xff] %vm284, %v1182
        %v1185 = vmul.f32 %v1164, %v474
        %v1186 = vlaneseq
        %v1187 = vshrl.u32 %v1186, 7
        %v1188 = vsub.s32 0, %v1187
        %v1189 = vrot.slane %v279, %v1188
        %v1190 = vmul.f32 %v1185, %v1189
        %s1191 = scalar_lea.vmem %s266, 24 [#allocation9]
        %1192 = vst.msk [vmem:[%s1191] sm:$0xff] %vm284, %v1190
        %v1193 = vlaneseq
        %v1194 = vshrl.u32 %v1193, 7
        %v1195 = vsub.s32 3, %v1194
        %v1196 = vrot.slane %v279, %v1195
        %v1197 = vmul.f32 %v1185, %v1196
        %s1198 = scalar_lea.vmem %s266, 32 [#allocation9]
        %1199 = vst.msk [vmem:[%s1198] sm:$0xff] %vm284, %v1197
        %v1200 = vlaneseq
        %v1201 = vshrl.u32 %v1200, 7
        %v1202 = vsub.s32 2, %v1201
        %v1203 = vrot.slane %v279, %v1202
        %v1204 = vmul.f32 %v1165, %v1203
        %v1205 = vadd.f32 %v1204, %v506
        %s1206 = scalar_lea.vmem %s266, 40 [#allocation9]
        %1207 = vst.msk [vmem:[%s1206] sm:$0xff] %vm284, %v1205
        %1208 = vmatprep.subr.mxu0 0.0
        %v1209 = vand.u32 %v400, 4294901760
        %1210 = vmatpush1.msra.mxu0 %v1209
        %1211 = vmatprep.subr.mxu0 0.0
        %v1212 = vand.u32 %v401, 4294901760
        %1213 = vmatpush1.msra.mxu0 %v1212
        %1214 = vmatprep.subr.mxu0 0.0
        %v1215 = vand.u32 %v402, 4294901760
        %1216 = vmatpush1.msra.mxu0 %v1215
        %1217 = vmatprep.subr.mxu0 0.0
        %v1218 = vand.u32 %v403, 4294901760
        %1219 = vmatpush1.msra.mxu0 %v1218
        %1220 = vmatprep.subr.mxu0 0.0
        %v1221 = vand.u32 %v404, 4294901760
        %1222 = vmatpush1.msra.mxu0 %v1221
        %1223 = vmatprep.subr.mxu0 0.0
        %v1224 = vand.u32 %v405, 4294901760
        %1225 = vmatpush1.msra.mxu0 %v1224
        %1226 = vmatprep.subr.mxu0 0.0
        %v1227 = vand.u32 %v406, 4294901760
        %1228 = vmatpush1.msra.mxu0 %v1227
        %1229 = vmatprep.subr.mxu0 0.0
        %v1230 = vand.u32 %v407, 4294901760
        %1231 = vmatpush1.msra.mxu0 %v1230
        %1232 = vmatprep.subr.mxu0 0.0
        %v1233 = vand.u32 %v408, 4294901760
        %1234 = vmatpush1.msra.mxu0 %v1233
        %1235 = vmatprep.subr.mxu0 0.0
        %v1236 = vand.u32 %v409, 4294901760
        %1237 = vmatpush1.msra.mxu0 %v1236
        %1238 = vmatprep.subr.mxu0 0.0
        %v1239 = vand.u32 %v410, 4294901760
        %1240 = vmatpush1.msra.mxu0 %v1239
        %1241 = vmatprep.subr.mxu0 0.0
        %v1242 = vand.u32 %v411, 4294901760
        %1243 = vmatpush1.msra.mxu0 %v1242
        %1244 = vmatprep.subr.mxu0 0.0
        %v1245 = vand.u32 %v412, 4294901760
        %1246 = vmatpush1.msra.mxu0 %v1245
        %1247 = vmatprep.subr.mxu0 0.0
        %v1248 = vand.u32 %v413, 4294901760
        %1249 = vmatpush1.msra.mxu0 %v1248
        %1250 = vmatprep.subr.mxu0 0.0
        %v1251 = vand.u32 %v414, 4294901760
        %1252 = vmatpush1.msra.mxu0 %v1251
        %1253 = vmatprep.subr.mxu0 0.0
        %v1254 = vand.u32 %v415, 4294901760
        %1255 = vmatpush1.msra.mxu0 %v1254
        %1256 = vmatprep.subr.mxu0 0.0
        %1257 = vmatpush1.msra.mxu0 0.0
        %1258 = vmatprep.subr.mxu0 0.0
        %1259 = vmatpush1.msra.mxu0 0.0
        %1260 = vmatprep.subr.mxu0 0.0
        %1261 = vmatpush1.msra.mxu0 0.0
        %1262 = vmatprep.subr.mxu0 0.0
        %1263 = vmatpush1.msra.mxu0 0.0
        %1264 = vmatprep.subr.mxu0 0.0
        %1265 = vmatpush1.msra.mxu0 0.0
        %1266 = vmatprep.subr.mxu0 0.0
        %1267 = vmatpush1.msra.mxu0 0.0
        %1268 = vmatprep.subr.mxu0 0.0
        %1269 = vmatpush1.msra.mxu0 0.0
        %1270 = vmatprep.subr.mxu0 0.0
        %1271 = vmatpush1.msra.mxu0 0.0
        %1272 = vmatprep.subr.mxu0 0.0
        %1273 = vmatpush1.msra.mxu0 0.0
        %1274 = vmatprep.subr.mxu0 0.0
        %1275 = vmatpush1.msra.mxu0 0.0
        %1276 = vmatprep.subr.mxu0 0.0
        %1277 = vmatpush1.msra.mxu0 0.0
        %1278 = vmatprep.subr.mxu0 0.0
        %1279 = vmatpush1.msra.mxu0 0.0
        %1280 = vmatprep.subr.mxu0 0.0
        %1281 = vmatpush1.msra.mxu0 0.0
        %1282 = vmatprep.subr.mxu0 0.0
        %1283 = vmatpush1.msra.mxu0 0.0
        %1284 = vmatprep.subr.mxu0 0.0
        %1285 = vmatpush1.msra.mxu0 0.0
        %1286 = vmatprep.subr.mxu0 0.0
        %1287 = vmatpush1.msra.mxu0 0.0
        %1288 = vmatprep.mubr.f32.mxu0 0.0
        %v1289 = vand.u32 %v1205, 4294901760
        %v1290 = vsub.f32 %v1205, %v1289
        %v1291 = vand.u32 %v1290, 4294901760
        %v1292 = vsub.f32 %v1290, %v1291
        %v1293 = vand.u32 %v1292, 4294901760
        %1294 = vmatmul.mubr.f32.gmra.mrb[0].mxu0 %v1293
        %v1295 = vpop.f32.mrb[0].mxu0
        %v1296 = vadd.f32 0.0, %v1295
        %v1297 = vpop.f32.mrb[0].mxu0
        %1298 = vdwg.mxu0
        %1299 = vmatprep.subr.mxu0 0.0
        %v1300 = vand.u32 %v400, 4294901760
        %v1301 = vsub.f32 %v400, %v1300
        %v1302 = vand.u32 %v1301, 4294901760
        %v1303 = vsub.f32 %v1301, %v1302
        %v1304 = vand.u32 %v1303, 4294901760
        %1305 = vmatpush1.msra.mxu0 %v1304
        %1306 = vmatprep.subr.mxu0 0.0
        %v1307 = vand.u32 %v401, 4294901760
        %v1308 = vsub.f32 %v401, %v1307
        %v1309 = vand.u32 %v1308, 4294901760
        %v1310 = vsub.f32 %v1308, %v1309
        %v1311 = vand.u32 %v1310, 4294901760
        %1312 = vmatpush1.msra.mxu0 %v1311
        %1313 = vmatprep.subr.mxu0 0.0
        %v1314 = vand.u32 %v402, 4294901760
        %v1315 = vsub.f32 %v402, %v1314
        %v1316 = vand.u32 %v1315, 4294901760
        %v1317 = vsub.f32 %v1315, %v1316
        %v1318 = vand.u32 %v1317, 4294901760
        %1319 = vmatpush1.msra.mxu0 %v1318
        %1320 = vmatprep.subr.mxu0 0.0
        %v1321 = vand.u32 %v403, 4294901760
        %v1322 = vsub.f32 %v403, %v1321
        %v1323 = vand.u32 %v1322, 4294901760
        %v1324 = vsub.f32 %v1322, %v1323
        %v1325 = vand.u32 %v1324, 4294901760
        %1326 = vmatpush1.msra.mxu0 %v1325
        %1327 = vmatprep.subr.mxu0 0.0
        %v1328 = vand.u32 %v404, 4294901760
        %v1329 = vsub.f32 %v404, %v1328
        %v1330 = vand.u32 %v1329, 4294901760
        %v1331 = vsub.f32 %v1329, %v1330
        %v1332 = vand.u32 %v1331, 4294901760
        %1333 = vmatpush1.msra.mxu0 %v1332
        %1334 = vmatprep.subr.mxu0 0.0
        %v1335 = vand.u32 %v405, 4294901760
        %v1336 = vsub.f32 %v405, %v1335
        %v1337 = vand.u32 %v1336, 4294901760
        %v1338 = vsub.f32 %v1336, %v1337
        %v1339 = vand.u32 %v1338, 4294901760
        %1340 = vmatpush1.msra.mxu0 %v1339
        %1341 = vmatprep.subr.mxu0 0.0
        %v1342 = vand.u32 %v406, 4294901760
        %v1343 = vsub.f32 %v406, %v1342
        %v1344 = vand.u32 %v1343, 4294901760
        %v1345 = vsub.f32 %v1343, %v1344
        %v1346 = vand.u32 %v1345, 4294901760
        %1347 = vmatpush1.msra.mxu0 %v1346
        %1348 = vmatprep.subr.mxu0 0.0
        %v1349 = vand.u32 %v407, 4294901760
        %v1350 = vsub.f32 %v407, %v1349
        %v1351 = vand.u32 %v1350, 4294901760
        %v1352 = vsub.f32 %v1350, %v1351
        %v1353 = vand.u32 %v1352, 4294901760
        %1354 = vmatpush1.msra.mxu0 %v1353
        %1355 = vmatprep.subr.mxu0 0.0
        %v1356 = vand.u32 %v408, 4294901760
        %v1357 = vsub.f32 %v408, %v1356
        %v1358 = vand.u32 %v1357, 4294901760
        %v1359 = vsub.f32 %v1357, %v1358
        %v1360 = vand.u32 %v1359, 4294901760
        %1361 = vmatpush1.msra.mxu0 %v1360
        %1362 = vmatprep.subr.mxu0 0.0
        %v1363 = vand.u32 %v409, 4294901760
        %v1364 = vsub.f32 %v409, %v1363
        %v1365 = vand.u32 %v1364, 4294901760
        %v1366 = vsub.f32 %v1364, %v1365
        %v1367 = vand.u32 %v1366, 4294901760
        %1368 = vmatpush1.msra.mxu0 %v1367
        %1369 = vmatprep.subr.mxu0 0.0
        %v1370 = vand.u32 %v410, 4294901760
        %v1371 = vsub.f32 %v410, %v1370
        %v1372 = vand.u32 %v1371, 4294901760
        %v1373 = vsub.f32 %v1371, %v1372
        %v1374 = vand.u32 %v1373, 4294901760
        %1375 = vmatpush1.msra.mxu0 %v1374
        %1376 = vmatprep.subr.mxu0 0.0
        %v1377 = vand.u32 %v411, 4294901760
        %v1378 = vsub.f32 %v411, %v1377
        %v1379 = vand.u32 %v1378, 4294901760
        %v1380 = vsub.f32 %v1378, %v1379
        %v1381 = vand.u32 %v1380, 4294901760
        %1382 = vmatpush1.msra.mxu0 %v1381
        %1383 = vmatprep.subr.mxu0 0.0
        %v1384 = vand.u32 %v412, 4294901760
        %v1385 = vsub.f32 %v412, %v1384
        %v1386 = vand.u32 %v1385, 4294901760
        %v1387 = vsub.f32 %v1385, %v1386
        %v1388 = vand.u32 %v1387, 4294901760
        %1389 = vmatpush1.msra.mxu0 %v1388
        %1390 = vmatprep.subr.mxu0 0.0
        %v1391 = vand.u32 %v413, 4294901760
        %v1392 = vsub.f32 %v413, %v1391
        %v1393 = vand.u32 %v1392, 4294901760
        %v1394 = vsub.f32 %v1392, %v1393
        %v1395 = vand.u32 %v1394, 4294901760
        %1396 = vmatpush1.msra.mxu0 %v1395
        %1397 = vmatprep.subr.mxu0 0.0
        %v1398 = vand.u32 %v414, 4294901760
        %v1399 = vsub.f32 %v414, %v1398
        %v1400 = vand.u32 %v1399, 4294901760
        %v1401 = vsub.f32 %v1399, %v1400
        %v1402 = vand.u32 %v1401, 4294901760
        %1403 = vmatpush1.msra.mxu0 %v1402
        %1404 = vmatprep.subr.mxu0 0.0
        %v1405 = vand.u32 %v415, 4294901760
        %v1406 = vsub.f32 %v415, %v1405
        %v1407 = vand.u32 %v1406, 4294901760
        %v1408 = vsub.f32 %v1406, %v1407
        %v1409 = vand.u32 %v1408, 4294901760
        %1410 = vmatpush1.msra.mxu0 %v1409
        %1411 = vmatprep.subr.mxu0 0.0
        %1412 = vmatpush1.msra.mxu0 0.0
        %1413 = vmatprep.subr.mxu0 0.0
        %1414 = vmatpush1.msra.mxu0 0.0
        %1415 = vmatprep.subr.mxu0 0.0
        %1416 = vmatpush1.msra.mxu0 0.0
        %1417 = vmatprep.subr.mxu0 0.0
        %1418 = vmatpush1.msra.mxu0 0.0
        %1419 = vmatprep.subr.mxu0 0.0
        %1420 = vmatpush1.msra.mxu0 0.0
        %1421 = vmatprep.subr.mxu0 0.0
        %1422 = vmatpush1.msra.mxu0 0.0
        %1423 = vmatprep.subr.mxu0 0.0
        %1424 = vmatpush1.msra.mxu0 0.0
        %1425 = vmatprep.subr.mxu0 0.0
        %1426 = vmatpush1.msra.mxu0 0.0
        %1427 = vmatprep.subr.mxu0 0.0
        %1428 = vmatpush1.msra.mxu0 0.0
        %1429 = vmatprep.subr.mxu0 0.0
        %1430 = vmatpush1.msra.mxu0 0.0
        %1431 = vmatprep.subr.mxu0 0.0
        %1432 = vmatpush1.msra.mxu0 0.0
        %1433 = vmatprep.subr.mxu0 0.0
        %1434 = vmatpush1.msra.mxu0 0.0
        %1435 = vmatprep.subr.mxu0 0.0
        %1436 = vmatpush1.msra.mxu0 0.0
        %1437 = vmatprep.subr.mxu0 0.0
        %1438 = vmatpush1.msra.mxu0 0.0
        %1439 = vmatprep.subr.mxu0 0.0
        %1440 = vmatpush1.msra.mxu0 0.0
        %1441 = vmatprep.subr.mxu0 0.0
        %1442 = vmatpush1.msra.mxu0 0.0
        %1443 = vmatprep.mubr.f32.mxu0 0.0
        %v1444 = vand.u32 %v1205, 4294901760
        %1445 = vmatmul.mubr.f32.gmra.mrb[0].mxu0 %v1444
        %v1446 = vpop.f32.mrb[0].mxu0
        %v1447 = vadd.f32 %v1296, %v1446
        %v1448 = vpop.f32.mrb[0].mxu0
        %1449 = vdwg.mxu0
        %1450 = vmatprep.subr.mxu0 0.0
        %v1451 = vand.u32 %v400, 4294901760
        %v1452 = vsub.f32 %v400, %v1451
        %1453 = vmatpush1.msra.mxu0 %v1452
        %1454 = vmatprep.subr.mxu0 0.0
        %v1455 = vand.u32 %v401, 4294901760
        %v1456 = vsub.f32 %v401, %v1455
        %1457 = vmatpush1.msra.mxu0 %v1456
        %1458 = vmatprep.subr.mxu0 0.0
        %v1459 = vand.u32 %v402, 4294901760
        %v1460 = vsub.f32 %v402, %v1459
        %1461 = vmatpush1.msra.mxu0 %v1460
        %1462 = vmatprep.subr.mxu0 0.0
        %v1463 = vand.u32 %v403, 4294901760
        %v1464 = vsub.f32 %v403, %v1463
        %1465 = vmatpush1.msra.mxu0 %v1464
        %1466 = vmatprep.subr.mxu0 0.0
        %v1467 = vand.u32 %v404, 4294901760
        %v1468 = vsub.f32 %v404, %v1467
        %1469 = vmatpush1.msra.mxu0 %v1468
        %1470 = vmatprep.subr.mxu0 0.0
        %v1471 = vand.u32 %v405, 4294901760
        %v1472 = vsub.f32 %v405, %v1471
        %1473 = vmatpush1.msra.mxu0 %v1472
        %1474 = vmatprep.subr.mxu0 0.0
        %v1475 = vand.u32 %v406, 4294901760
        %v1476 = vsub.f32 %v406, %v1475
        %1477 = vmatpush1.msra.mxu0 %v1476
        %1478 = vmatprep.subr.mxu0 0.0
        %v1479 = vand.u32 %v407, 4294901760
        %v1480 = vsub.f32 %v407, %v1479
        %1481 = vmatpush1.msra.mxu0 %v1480
        %1482 = vmatprep.subr.mxu0 0.0
        %v1483 = vand.u32 %v408, 4294901760
        %v1484 = vsub.f32 %v408, %v1483
        %1485 = vmatpush1.msra.mxu0 %v1484
        %1486 = vmatprep.subr.mxu0 0.0
        %v1487 = vand.u32 %v409, 4294901760
        %v1488 = vsub.f32 %v409, %v1487
        %1489 = vmatpush1.msra.mxu0 %v1488
        %1490 = vmatprep.subr.mxu0 0.0
        %v1491 = vand.u32 %v410, 4294901760
        %v1492 = vsub.f32 %v410, %v1491
        %1493 = vmatpush1.msra.mxu0 %v1492
        %1494 = vmatprep.subr.mxu0 0.0
        %v1495 = vand.u32 %v411, 4294901760
        %v1496 = vsub.f32 %v411, %v1495
        %1497 = vmatpush1.msra.mxu0 %v1496
        %1498 = vmatprep.subr.mxu0 0.0
        %v1499 = vand.u32 %v412, 4294901760
        %v1500 = vsub.f32 %v412, %v1499
        %1501 = vmatpush1.msra.mxu0 %v1500
        %1502 = vmatprep.subr.mxu0 0.0
        %v1503 = vand.u32 %v413, 4294901760
        %v1504 = vsub.f32 %v413, %v1503
        %1505 = vmatpush1.msra.mxu0 %v1504
        %1506 = vmatprep.subr.mxu0 0.0
        %v1507 = vand.u32 %v414, 4294901760
        %v1508 = vsub.f32 %v414, %v1507
        %1509 = vmatpush1.msra.mxu0 %v1508
        %1510 = vmatprep.subr.mxu0 0.0
        %v1511 = vand.u32 %v415, 4294901760
        %v1512 = vsub.f32 %v415, %v1511
        %1513 = vmatpush1.msra.mxu0 %v1512
        %1514 = vmatprep.subr.mxu0 0.0
        %1515 = vmatpush1.msra.mxu0 0.0
        %1516 = vmatprep.subr.mxu0 0.0
        %1517 = vmatpush1.msra.mxu0 0.0
        %1518 = vmatprep.subr.mxu0 0.0
        %1519 = vmatpush1.msra.mxu0 0.0
        %1520 = vmatprep.subr.mxu0 0.0
        %1521 = vmatpush1.msra.mxu0 0.0
        %1522 = vmatprep.subr.mxu0 0.0
        %1523 = vmatpush1.msra.mxu0 0.0
        %1524 = vmatprep.subr.mxu0 0.0
        %1525 = vmatpush1.msra.mxu0 0.0
        %1526 = vmatprep.subr.mxu0 0.0
        %1527 = vmatpush1.msra.mxu0 0.0
        %1528 = vmatprep.subr.mxu0 0.0
        %1529 = vmatpush1.msra.mxu0 0.0
        %1530 = vmatprep.subr.mxu0 0.0
        %1531 = vmatpush1.msra.mxu0 0.0
        %1532 = vmatprep.subr.mxu0 0.0
        %1533 = vmatpush1.msra.mxu0 0.0
        %1534 = vmatprep.subr.mxu0 0.0
        %1535 = vmatpush1.msra.mxu0 0.0
        %1536 = vmatprep.subr.mxu0 0.0
        %1537 = vmatpush1.msra.mxu0 0.0
        %1538 = vmatprep.subr.mxu0 0.0
        %1539 = vmatpush1.msra.mxu0 0.0
        %1540 = vmatprep.subr.mxu0 0.0
        %1541 = vmatpush1.msra.mxu0 0.0
        %1542 = vmatprep.subr.mxu0 0.0
        %1543 = vmatpush1.msra.mxu0 0.0
        %1544 = vmatprep.subr.mxu0 0.0
        %1545 = vmatpush1.msra.mxu0 0.0
        %1546 = vmatprep.mubr.f32.mxu0 0.0
        %v1547 = vand.u32 %v1205, 4294901760
        %v1548 = vsub.f32 %v1205, %v1547
        %1549 = vmatmul.mubr.f32.gmra.mrb[0].mxu0 %v1548
        %v1550 = vpop.f32.mrb[0].mxu0
        %v1551 = vadd.f32 %v1447, %v1550
        %v1552 = vpop.f32.mrb[0].mxu0
        %1553 = vdwg.mxu0
        %1554 = vmatprep.subr.mxu0 0.0
        %v1555 = vand.u32 %v400, 4294901760
        %1556 = vmatpush1.msra.mxu0 %v1555
        %1557 = vmatprep.subr.mxu0 0.0
        %v1558 = vand.u32 %v401, 4294901760
        %1559 = vmatpush1.msra.mxu0 %v1558
        %1560 = vmatprep.subr.mxu0 0.0
        %v1561 = vand.u32 %v402, 4294901760
        %1562 = vmatpush1.msra.mxu0 %v1561
        %1563 = vmatprep.subr.mxu0 0.0
        %v1564 = vand.u32 %v403, 4294901760
        %1565 = vmatpush1.msra.mxu0 %v1564
        %1566 = vmatprep.subr.mxu0 0.0
        %v1567 = vand.u32 %v404, 4294901760
        %1568 = vmatpush1.msra.mxu0 %v1567
        %1569 = vmatprep.subr.mxu0 0.0
        %v1570 = vand.u32 %v405, 4294901760
        %1571 = vmatpush1.msra.mxu0 %v1570
        %1572 = vmatprep.subr.mxu0 0.0
        %v1573 = vand.u32 %v406, 4294901760
        %1574 = vmatpush1.msra.mxu0 %v1573
        %1575 = vmatprep.subr.mxu0 0.0
        %v1576 = vand.u32 %v407, 4294901760
        %1577 = vmatpush1.msra.mxu0 %v1576
        %1578 = vmatprep.subr.mxu0 0.0
        %v1579 = vand.u32 %v408, 4294901760
        %1580 = vmatpush1.msra.mxu0 %v1579
        %1581 = vmatprep.subr.mxu0 0.0
        %v1582 = vand.u32 %v409, 4294901760
        %1583 = vmatpush1.msra.mxu0 %v1582
        %1584 = vmatprep.subr.mxu0 0.0
        %v1585 = vand.u32 %v410, 4294901760
        %1586 = vmatpush1.msra.mxu0 %v1585
        %1587 = vmatprep.subr.mxu0 0.0
        %v1588 = vand.u32 %v411, 4294901760
        %1589 = vmatpush1.msra.mxu0 %v1588
        %1590 = vmatprep.subr.mxu0 0.0
        %v1591 = vand.u32 %v412, 4294901760
        %1592 = vmatpush1.msra.mxu0 %v1591
        %1593 = vmatprep.subr.mxu0 0.0
        %v1594 = vand.u32 %v413, 4294901760
        %1595 = vmatpush1.msra.mxu0 %v1594
        %1596 = vmatprep.subr.mxu0 0.0
        %v1597 = vand.u32 %v414, 4294901760
        %1598 = vmatpush1.msra.mxu0 %v1597
        %1599 = vmatprep.subr.mxu0 0.0
        %v1600 = vand.u32 %v415, 4294901760
        %1601 = vmatpush1.msra.mxu0 %v1600
        %1602 = vmatprep.subr.mxu0 0.0
        %1603 = vmatpush1.msra.mxu0 0.0
        %1604 = vmatprep.subr.mxu0 0.0
        %1605 = vmatpush1.msra.mxu0 0.0
        %1606 = vmatprep.subr.mxu0 0.0
        %1607 = vmatpush1.msra.mxu0 0.0
        %1608 = vmatprep.subr.mxu0 0.0
        %1609 = vmatpush1.msra.mxu0 0.0
        %1610 = vmatprep.subr.mxu0 0.0
        %1611 = vmatpush1.msra.mxu0 0.0
        %1612 = vmatprep.subr.mxu0 0.0
        %1613 = vmatpush1.msra.mxu0 0.0
        %1614 = vmatprep.subr.mxu0 0.0
        %1615 = vmatpush1.msra.mxu0 0.0
        %1616 = vmatprep.subr.mxu0 0.0
        %1617 = vmatpush1.msra.mxu0 0.0
        %1618 = vmatprep.subr.mxu0 0.0
        %1619 = vmatpush1.msra.mxu0 0.0
        %1620 = vmatprep.subr.mxu0 0.0
        %1621 = vmatpush1.msra.mxu0 0.0
        %1622 = vmatprep.subr.mxu0 0.0
        %1623 = vmatpush1.msra.mxu0 0.0
        %1624 = vmatprep.subr.mxu0 0.0
        %1625 = vmatpush1.msra.mxu0 0.0
        %1626 = vmatprep.subr.mxu0 0.0
        %1627 = vmatpush1.msra.mxu0 0.0
        %1628 = vmatprep.subr.mxu0 0.0
        %1629 = vmatpush1.msra.mxu0 0.0
        %1630 = vmatprep.subr.mxu0 0.0
        %1631 = vmatpush1.msra.mxu0 0.0
        %1632 = vmatprep.subr.mxu0 0.0
        %1633 = vmatpush1.msra.mxu0 0.0
        %1634 = vmatprep.mubr.f32.mxu0 0.0
        %v1635 = vand.u32 %v1205, 4294901760
        %v1636 = vsub.f32 %v1205, %v1635
        %v1637 = vand.u32 %v1636, 4294901760
        %1638 = vmatmul.mubr.f32.gmra.mrb[0].mxu0 %v1637
        %v1639 = vpop.f32.mrb[0].mxu0
        %v1640 = vadd.f32 %v1551, %v1639
        %v1641 = vpop.f32.mrb[0].mxu0
        %1642 = vdwg.mxu0
        %1643 = vmatprep.subr.mxu0 0.0
        %v1644 = vand.u32 %v400, 4294901760
        %v1645 = vsub.f32 %v400, %v1644
        %v1646 = vand.u32 %v1645, 4294901760
        %1647 = vmatpush1.msra.mxu0 %v1646
        %1648 = vmatprep.subr.mxu0 0.0
        %v1649 = vand.u32 %v401, 4294901760
        %v1650 = vsub.f32 %v401, %v1649
        %v1651 = vand.u32 %v1650, 4294901760
        %1652 = vmatpush1.msra.mxu0 %v1651
        %1653 = vmatprep.subr.mxu0 0.0
        %v1654 = vand.u32 %v402, 4294901760
        %v1655 = vsub.f32 %v402, %v1654
        %v1656 = vand.u32 %v1655, 4294901760
        %1657 = vmatpush1.msra.mxu0 %v1656
        %1658 = vmatprep.subr.mxu0 0.0
        %v1659 = vand.u32 %v403, 4294901760
        %v1660 = vsub.f32 %v403, %v1659
        %v1661 = vand.u32 %v1660, 4294901760
        %1662 = vmatpush1.msra.mxu0 %v1661
        %1663 = vmatprep.subr.mxu0 0.0
        %v1664 = vand.u32 %v404, 4294901760
        %v1665 = vsub.f32 %v404, %v1664
        %v1666 = vand.u32 %v1665, 4294901760
        %1667 = vmatpush1.msra.mxu0 %v1666
        %1668 = vmatprep.subr.mxu0 0.0
        %v1669 = vand.u32 %v405, 4294901760
        %v1670 = vsub.f32 %v405, %v1669
        %v1671 = vand.u32 %v1670, 4294901760
        %1672 = vmatpush1.msra.mxu0 %v1671
        %1673 = vmatprep.subr.mxu0 0.0
        %v1674 = vand.u32 %v406, 4294901760
        %v1675 = vsub.f32 %v406, %v1674
        %v1676 = vand.u32 %v1675, 4294901760
        %1677 = vmatpush1.msra.mxu0 %v1676
        %1678 = vmatprep.subr.mxu0 0.0
        %v1679 = vand.u32 %v407, 4294901760
        %v1680 = vsub.f32 %v407, %v1679
        %v1681 = vand.u32 %v1680, 4294901760
        %1682 = vmatpush1.msra.mxu0 %v1681
        %1683 = vmatprep.subr.mxu0 0.0
        %v1684 = vand.u32 %v408, 4294901760
        %v1685 = vsub.f32 %v408, %v1684
        %v1686 = vand.u32 %v1685, 4294901760
        %1687 = vmatpush1.msra.mxu0 %v1686
        %1688 = vmatprep.subr.mxu0 0.0
        %v1689 = vand.u32 %v409, 4294901760
        %v1690 = vsub.f32 %v409, %v1689
        %v1691 = vand.u32 %v1690, 4294901760
        %1692 = vmatpush1.msra.mxu0 %v1691
        %1693 = vmatprep.subr.mxu0 0.0
        %v1694 = vand.u32 %v410, 4294901760
        %v1695 = vsub.f32 %v410, %v1694
        %v1696 = vand.u32 %v1695, 4294901760
        %1697 = vmatpush1.msra.mxu0 %v1696
        %1698 = vmatprep.subr.mxu0 0.0
        %v1699 = vand.u32 %v411, 4294901760
        %v1700 = vsub.f32 %v411, %v1699
        %v1701 = vand.u32 %v1700, 4294901760
        %1702 = vmatpush1.msra.mxu0 %v1701
        %1703 = vmatprep.subr.mxu0 0.0
        %v1704 = vand.u32 %v412, 4294901760
        %v1705 = vsub.f32 %v412, %v1704
        %v1706 = vand.u32 %v1705, 4294901760
        %1707 = vmatpush1.msra.mxu0 %v1706
        %1708 = vmatprep.subr.mxu0 0.0
        %v1709 = vand.u32 %v413, 4294901760
        %v1710 = vsub.f32 %v413, %v1709
        %v1711 = vand.u32 %v1710, 4294901760
        %1712 = vmatpush1.msra.mxu0 %v1711
        %1713 = vmatprep.subr.mxu0 0.0
        %v1714 = vand.u32 %v414, 4294901760
        %v1715 = vsub.f32 %v414, %v1714
        %v1716 = vand.u32 %v1715, 4294901760
        %1717 = vmatpush1.msra.mxu0 %v1716
        %1718 = vmatprep.subr.mxu0 0.0
        %v1719 = vand.u32 %v415, 4294901760
        %v1720 = vsub.f32 %v415, %v1719
        %v1721 = vand.u32 %v1720, 4294901760
        %1722 = vmatpush1.msra.mxu0 %v1721
        %1723 = vmatprep.subr.mxu0 0.0
        %1724 = vmatpush1.msra.mxu0 0.0
        %1725 = vmatprep.subr.mxu0 0.0
        %1726 = vmatpush1.msra.mxu0 0.0
        %1727 = vmatprep.subr.mxu0 0.0
        %1728 = vmatpush1.msra.mxu0 0.0
        %1729 = vmatprep.subr.mxu0 0.0
        %1730 = vmatpush1.msra.mxu0 0.0
        %1731 = vmatprep.subr.mxu0 0.0
        %1732 = vmatpush1.msra.mxu0 0.0
        %1733 = vmatprep.subr.mxu0 0.0
        %1734 = vmatpush1.msra.mxu0 0.0
        %1735 = vmatprep.subr.mxu0 0.0
        %1736 = vmatpush1.msra.mxu0 0.0
        %1737 = vmatprep.subr.mxu0 0.0
        %1738 = vmatpush1.msra.mxu0 0.0
        %1739 = vmatprep.subr.mxu0 0.0
        %1740 = vmatpush1.msra.mxu0 0.0
        %1741 = vmatprep.subr.mxu0 0.0
        %1742 = vmatpush1.msra.mxu0 0.0
        %1743 = vmatprep.subr.mxu0 0.0
        %1744 = vmatpush1.msra.mxu0 0.0
        %1745 = vmatprep.subr.mxu0 0.0
        %1746 = vmatpush1.msra.mxu0 0.0
        %1747 = vmatprep.subr.mxu0 0.0
        %1748 = vmatpush1.msra.mxu0 0.0
        %1749 = vmatprep.subr.mxu0 0.0
        %1750 = vmatpush1.msra.mxu0 0.0
        %1751 = vmatprep.subr.mxu0 0.0
        %1752 = vmatpush1.msra.mxu0 0.0
        %1753 = vmatprep.subr.mxu0 0.0
        %1754 = vmatpush1.msra.mxu0 0.0
        %1755 = vmatprep.mubr.f32.mxu0 0.0
        %v1756 = vand.u32 %v1205, 4294901760
        %1757 = vmatmul.mubr.f32.gmra.mrb[0].mxu0 %v1756
        %v1758 = vpop.f32.mrb[0].mxu0
        %v1759 = vadd.f32 %v1640, %v1758
        %v1760 = vpop.f32.mrb[0].mxu0
        %1761 = vdwg.mxu0
        %1762 = vmatprep.subr.mxu0 0.0
        %v1763 = vand.u32 %v400, 4294901760
        %1764 = vmatpush1.msra.mxu0 %v1763
        %1765 = vmatprep.subr.mxu0 0.0
        %v1766 = vand.u32 %v401, 4294901760
        %1767 = vmatpush1.msra.mxu0 %v1766
        %1768 = vmatprep.subr.mxu0 0.0
        %v1769 = vand.u32 %v402, 4294901760
        %1770 = vmatpush1.msra.mxu0 %v1769
        %1771 = vmatprep.subr.mxu0 0.0
        %v1772 = vand.u32 %v403, 4294901760
        %1773 = vmatpush1.msra.mxu0 %v1772
        %1774 = vmatprep.subr.mxu0 0.0
        %v1775 = vand.u32 %v404, 4294901760
        %1776 = vmatpush1.msra.mxu0 %v1775
        %1777 = vmatprep.subr.mxu0 0.0
        %v1778 = vand.u32 %v405, 4294901760
        %1779 = vmatpush1.msra.mxu0 %v1778
        %1780 = vmatprep.subr.mxu0 0.0
        %v1781 = vand.u32 %v406, 4294901760
        %1782 = vmatpush1.msra.mxu0 %v1781
        %1783 = vmatprep.subr.mxu0 0.0
        %v1784 = vand.u32 %v407, 4294901760
        %1785 = vmatpush1.msra.mxu0 %v1784
        %1786 = vmatprep.subr.mxu0 0.0
        %v1787 = vand.u32 %v408, 4294901760
        %1788 = vmatpush1.msra.mxu0 %v1787
        %1789 = vmatprep.subr.mxu0 0.0
        %v1790 = vand.u32 %v409, 4294901760
        %1791 = vmatpush1.msra.mxu0 %v1790
        %1792 = vmatprep.subr.mxu0 0.0
        %v1793 = vand.u32 %v410, 4294901760
        %1794 = vmatpush1.msra.mxu0 %v1793
        %1795 = vmatprep.subr.mxu0 0.0
        %v1796 = vand.u32 %v411, 4294901760
        %1797 = vmatpush1.msra.mxu0 %v1796
        %1798 = vmatprep.subr.mxu0 0.0
        %v1799 = vand.u32 %v412, 4294901760
        %1800 = vmatpush1.msra.mxu0 %v1799
        %1801 = vmatprep.subr.mxu0 0.0
        %v1802 = vand.u32 %v413, 4294901760
        %1803 = vmatpush1.msra.mxu0 %v1802
        %1804 = vmatprep.subr.mxu0 0.0
        %v1805 = vand.u32 %v414, 4294901760
        %1806 = vmatpush1.msra.mxu0 %v1805
        %1807 = vmatprep.subr.mxu0 0.0
        %v1808 = vand.u32 %v415, 4294901760
        %1809 = vmatpush1.msra.mxu0 %v1808
        %1810 = vmatprep.subr.mxu0 0.0
        %1811 = vmatpush1.msra.mxu0 0.0
        %1812 = vmatprep.subr.mxu0 0.0
        %1813 = vmatpush1.msra.mxu0 0.0
        %1814 = vmatprep.subr.mxu0 0.0
        %1815 = vmatpush1.msra.mxu0 0.0
        %1816 = vmatprep.subr.mxu0 0.0
        %1817 = vmatpush1.msra.mxu0 0.0
        %1818 = vmatprep.subr.mxu0 0.0
        %1819 = vmatpush1.msra.mxu0 0.0
        %1820 = vmatprep.subr.mxu0 0.0
        %1821 = vmatpush1.msra.mxu0 0.0
        %1822 = vmatprep.subr.mxu0 0.0
        %1823 = vmatpush1.msra.mxu0 0.0
        %1824 = vmatprep.subr.mxu0 0.0
        %1825 = vmatpush1.msra.mxu0 0.0
        %1826 = vmatprep.subr.mxu0 0.0
        %1827 = vmatpush1.msra.mxu0 0.0
        %1828 = vmatprep.subr.mxu0 0.0
        %1829 = vmatpush1.msra.mxu0 0.0
        %1830 = vmatprep.subr.mxu0 0.0
        %1831 = vmatpush1.msra.mxu0 0.0
        %1832 = vmatprep.subr.mxu0 0.0
        %1833 = vmatpush1.msra.mxu0 0.0
        %1834 = vmatprep.subr.mxu0 0.0
        %1835 = vmatpush1.msra.mxu0 0.0
        %1836 = vmatprep.subr.mxu0 0.0
        %1837 = vmatpush1.msra.mxu0 0.0
        %1838 = vmatprep.subr.mxu0 0.0
        %1839 = vmatpush1.msra.mxu0 0.0
        %1840 = vmatprep.subr.mxu0 0.0
        %1841 = vmatpush1.msra.mxu0 0.0
        %1842 = vmatprep.mubr.f32.mxu0 0.0
        %v1843 = vand.u32 %v1205, 4294901760
        %1844 = vmatmul.mubr.f32.gmra.mrb[0].mxu0 %v1843
        %v1845 = vpop.f32.mrb[0].mxu0
        %v1846 = vadd.f32 %v1759, %v1845
        %v1847 = vpop.f32.mrb[0].mxu0
        %1848 = vdwg.mxu0
        %s1849 = scalar_lea.vmem %s266, 48 [#allocation9]
        %1850 = vst.msk [vmem:[%s1849] sm:$0xff] %vm284, %v1846
        %v1851 = vsub.f32 1.0, %v279
        %v1852 = vlaneseq
        %v1853 = vshrl.u32 %v1852, 7
        %v1854 = vsub.s32 6, %v1853
        %v1855 = vrot.slane %v1851, %v1854
        %v1856 = vmul.f32 %v1846, %v1855
        %s1857 = scalar_lea.vmem %s266, 56 [#allocation9]
        %1858 = vst.msk [vmem:[%s1857] sm:$0xff] %vm284, %v1856
        %v1859 = vadd.f32 %v1182, %v1190
        %v1860 = vadd.f32 %v1859, %v1856
        %s1861 = scalar_lea.vmem %s266, 8 [#allocation9]
        %1862 = vst.msk [vmem:[%s1861] sm:$0xff] %vm284, %v1860
        %v1863 = vstv %s275
        %v1864 = vmul.f32 %v417, %v1863
        %1866 = vset.pattern.permute.xlu0 0
        %1867 = vperm.xlu0 %1866, %v1864
        %v1868 = vpop.permute.xlu0 %1867
        %v1870 = vmul.f32 %v1190, %v1868
        %v1871 = vmul.f32 %v1197, %v478
        %v1872 = vsub.f32 1.0, %v1174
        %v1873 = vlaneseq
        %v1874 = vshrl.u32 %v1873, 7
        %v1875 = vsub.s32 1, %v1874
        %v1876 = vrot.slane %v1872, %v1875
        %v1877 = vmul.f32 %v1165, %v1876
        %v1878 = vsub.f32 %v1877, %v506
        %v1879 = vmul.f32 %v478, %v1878
        %v1880 = vsub.f32 %v1879, %v1870
        %v1881 = vsub.f32 %v1880, %v1871
        %s1882 = scalar_lea.vmem %s266, 64 [#allocation9]
        %1883 = vst.msk [vmem:[%s1882] sm:$0xff] %vm284, %v1881
        %v1884 = vadd.f32 %v1860, %v1881
        %s1885 = scalar_lea.vmem %s266, 96 [#allocation9]
        %1886 = vst.msk [vmem:[%s1885] sm:$0xff] %vm284, %v1884
        %v1887 = vsub.f32 %v1205, %v1846
        %1888 = vmatprep.subr.mxu0 0.0
        %v1889 = vand.u32 %v335, 4294901760
        %1890 = vmatpush1.msra.mxu0 %v1889
        %1891 = vmatprep.subr.mxu0 0.0
        %v1892 = vand.u32 %v336, 4294901760
        %1893 = vmatpush1.msra.mxu0 %v1892
        %1894 = vmatprep.subr.mxu0 0.0
        %v1895 = vand.u32 %v337, 4294901760
        %1896 = vmatpush1.msra.mxu0 %v1895
        %1897 = vmatprep.subr.mxu0 0.0
        %v1898 = vand.u32 %v338, 4294901760
        %1899 = vmatpush1.msra.mxu0 %v1898
        %1900 = vmatprep.subr.mxu0 0.0
        %v1901 = vand.u32 %v339, 4294901760
        %1902 = vmatpush1.msra.mxu0 %v1901
        %1903 = vmatprep.subr.mxu0 0.0
        %v1904 = vand.u32 %v340, 4294901760
        %1905 = vmatpush1.msra.mxu0 %v1904
        %1906 = vmatprep.subr.mxu0 0.0
        %v1907 = vand.u32 %v341, 4294901760
        %1908 = vmatpush1.msra.mxu0 %v1907
        %1909 = vmatprep.subr.mxu0 0.0
        %v1910 = vand.u32 %v342, 4294901760
        %1911 = vmatpush1.msra.mxu0 %v1910
        %1912 = vmatprep.subr.mxu0 0.0
        %v1913 = vand.u32 %v343, 4294901760
        %1914 = vmatpush1.msra.mxu0 %v1913
        %1915 = vmatprep.subr.mxu0 0.0
        %v1916 = vand.u32 %v344, 4294901760
        %1917 = vmatpush1.msra.mxu0 %v1916
        %1918 = vmatprep.subr.mxu0 0.0
        %v1919 = vand.u32 %v345, 4294901760
        %1920 = vmatpush1.msra.mxu0 %v1919
        %1921 = vmatprep.subr.mxu0 0.0
        %v1922 = vand.u32 %v346, 4294901760
        %1923 = vmatpush1.msra.mxu0 %v1922
        %1924 = vmatprep.subr.mxu0 0.0
        %v1925 = vand.u32 %v347, 4294901760
        %1926 = vmatpush1.msra.mxu0 %v1925
        %1927 = vmatprep.subr.mxu0 0.0
        %v1928 = vand.u32 %v348, 4294901760
        %1929 = vmatpush1.msra.mxu0 %v1928
        %1930 = vmatprep.subr.mxu0 0.0
        %v1931 = vand.u32 %v349, 4294901760
        %1932 = vmatpush1.msra.mxu0 %v1931
        %1933 = vmatprep.subr.mxu0 0.0
        %v1934 = vand.u32 %v350, 4294901760
        %1935 = vmatpush1.msra.mxu0 %v1934
        %1936 = vmatprep.subr.mxu0 0.0
        %1937 = vmatpush1.msra.mxu0 0.0
        %1938 = vmatprep.subr.mxu0 0.0
        %1939 = vmatpush1.msra.mxu0 0.0
        %1940 = vmatprep.subr.mxu0 0.0
        %1941 = vmatpush1.msra.mxu0 0.0
        %1942 = vmatprep.subr.mxu0 0.0
        %1943 = vmatpush1.msra.mxu0 0.0
        %1944 = vmatprep.subr.mxu0 0.0
        %1945 = vmatpush1.msra.mxu0 0.0
        %1946 = vmatprep.subr.mxu0 0.0
        %1947 = vmatpush1.msra.mxu0 0.0
        %1948 = vmatprep.subr.mxu0 0.0
        %1949 = vmatpush1.msra.mxu0 0.0
        %1950 = vmatprep.subr.mxu0 0.0
        %1951 = vmatpush1.msra.mxu0 0.0
        %1952 = vmatprep.subr.mxu0 0.0
        %1953 = vmatpush1.msra.mxu0 0.0
        %1954 = vmatprep.subr.mxu0 0.0
        %1955 = vmatpush1.msra.mxu0 0.0
        %1956 = vmatprep.subr.mxu0 0.0
        %1957 = vmatpush1.msra.mxu0 0.0
        %1958 = vmatprep.subr.mxu0 0.0
        %1959 = vmatpush1.msra.mxu0 0.0
        %1960 = vmatprep.subr.mxu0 0.0
        %1961 = vmatpush1.msra.mxu0 0.0
        %1962 = vmatprep.subr.mxu0 0.0
        %1963 = vmatpush1.msra.mxu0 0.0
        %1964 = vmatprep.subr.mxu0 0.0
        %1965 = vmatpush1.msra.mxu0 0.0
        %1966 = vmatprep.subr.mxu0 0.0
        %1967 = vmatpush1.msra.mxu0 0.0
        %1968 = vmatprep.mubr.f32.mxu0 0.0
        %v1969 = vand.u32 %v1887, 4294901760
        %v1970 = vsub.f32 %v1887, %v1969
        %v1971 = vand.u32 %v1970, 4294901760
        %v1972 = vsub.f32 %v1970, %v1971
        %v1973 = vand.u32 %v1972, 4294901760
        %1974 = vmatmul.mubr.f32.gmra.mrb[0].mxu0 %v1973
        %v1975 = vpop.f32.mrb[0].mxu0
        %v1976 = vadd.f32 0.0, %v1975
        %v1977 = vpop.f32.mrb[0].mxu0
        %1978 = vdwg.mxu0
        %1979 = vmatprep.subr.mxu0 0.0
        %v1980 = vand.u32 %v335, 4294901760
        %v1981 = vsub.f32 %v335, %v1980
        %v1982 = vand.u32 %v1981, 4294901760
        %v1983 = vsub.f32 %v1981, %v1982
        %v1984 = vand.u32 %v1983, 4294901760
        %1985 = vmatpush1.msra.mxu0 %v1984
        %1986 = vmatprep.subr.mxu0 0.0
        %v1987 = vand.u32 %v336, 4294901760
        %v1988 = vsub.f32 %v336, %v1987
        %v1989 = vand.u32 %v1988, 4294901760
        %v1990 = vsub.f32 %v1988, %v1989
        %v1991 = vand.u32 %v1990, 4294901760
        %1992 = vmatpush1.msra.mxu0 %v1991
        %1993 = vmatprep.subr.mxu0 0.0
        %v1994 = vand.u32 %v337, 4294901760
        %v1995 = vsub.f32 %v337, %v1994
        %v1996 = vand.u32 %v1995, 4294901760
        %v1997 = vsub.f32 %v1995, %v1996
        %v1998 = vand.u32 %v1997, 4294901760
        %1999 = vmatpush1.msra.mxu0 %v1998
        %2000 = vmatprep.subr.mxu0 0.0
        %v2001 = vand.u32 %v338, 4294901760
        %v2002 = vsub.f32 %v338, %v2001
        %v2003 = vand.u32 %v2002, 4294901760
        %v2004 = vsub.f32 %v2002, %v2003
        %v2005 = vand.u32 %v2004, 4294901760
        %2006 = vmatpush1.msra.mxu0 %v2005
        %2007 = vmatprep.subr.mxu0 0.0
        %v2008 = vand.u32 %v339, 4294901760
        %v2009 = vsub.f32 %v339, %v2008
        %v2010 = vand.u32 %v2009, 4294901760
        %v2011 = vsub.f32 %v2009, %v2010
        %v2012 = vand.u32 %v2011, 4294901760
        %2013 = vmatpush1.msra.mxu0 %v2012
        %2014 = vmatprep.subr.mxu0 0.0
        %v2015 = vand.u32 %v340, 4294901760
        %v2016 = vsub.f32 %v340, %v2015
        %v2017 = vand.u32 %v2016, 4294901760
        %v2018 = vsub.f32 %v2016, %v2017
        %v2019 = vand.u32 %v2018, 4294901760
        %2020 = vmatpush1.msra.mxu0 %v2019
        %2021 = vmatprep.subr.mxu0 0.0
        %v2022 = vand.u32 %v341, 4294901760
        %v2023 = vsub.f32 %v341, %v2022
        %v2024 = vand.u32 %v2023, 4294901760
        %v2025 = vsub.f32 %v2023, %v2024
        %v2026 = vand.u32 %v2025, 4294901760
        %2027 = vmatpush1.msra.mxu0 %v2026
        %2028 = vmatprep.subr.mxu0 0.0
        %v2029 = vand.u32 %v342, 4294901760
        %v2030 = vsub.f32 %v342, %v2029
        %v2031 = vand.u32 %v2030, 4294901760
        %v2032 = vsub.f32 %v2030, %v2031
        %v2033 = vand.u32 %v2032, 4294901760
        %2034 = vmatpush1.msra.mxu0 %v2033
        %2035 = vmatprep.subr.mxu0 0.0
        %v2036 = vand.u32 %v343, 4294901760
        %v2037 = vsub.f32 %v343, %v2036
        %v2038 = vand.u32 %v2037, 4294901760
        %v2039 = vsub.f32 %v2037, %v2038
        %v2040 = vand.u32 %v2039, 4294901760
        %2041 = vmatpush1.msra.mxu0 %v2040
        %2042 = vmatprep.subr.mxu0 0.0
        %v2043 = vand.u32 %v344, 4294901760
        %v2044 = vsub.f32 %v344, %v2043
        %v2045 = vand.u32 %v2044, 4294901760
        %v2046 = vsub.f32 %v2044, %v2045
        %v2047 = vand.u32 %v2046, 4294901760
        %2048 = vmatpush1.msra.mxu0 %v2047
        %2049 = vmatprep.subr.mxu0 0.0
        %v2050 = vand.u32 %v345, 4294901760
        %v2051 = vsub.f32 %v345, %v2050
        %v2052 = vand.u32 %v2051, 4294901760
        %v2053 = vsub.f32 %v2051, %v2052
        %v2054 = vand.u32 %v2053, 4294901760
        %2055 = vmatpush1.msra.mxu0 %v2054
        %2056 = vmatprep.subr.mxu0 0.0
        %v2057 = vand.u32 %v346, 4294901760
        %v2058 = vsub.f32 %v346, %v2057
        %v2059 = vand.u32 %v2058, 4294901760
        %v2060 = vsub.f32 %v2058, %v2059
        %v2061 = vand.u32 %v2060, 4294901760
        %2062 = vmatpush1.msra.mxu0 %v2061
        %2063 = vmatprep.subr.mxu0 0.0
        %v2064 = vand.u32 %v347, 4294901760
        %v2065 = vsub.f32 %v347, %v2064
        %v2066 = vand.u32 %v2065, 4294901760
        %v2067 = vsub.f32 %v2065, %v2066
        %v2068 = vand.u32 %v2067, 4294901760
        %2069 = vmatpush1.msra.mxu0 %v2068
        %2070 = vmatprep.subr.mxu0 0.0
        %v2071 = vand.u32 %v348, 4294901760
        %v2072 = vsub.f32 %v348, %v2071
        %v2073 = vand.u32 %v2072, 4294901760
        %v2074 = vsub.f32 %v2072, %v2073
        %v2075 = vand.u32 %v2074, 4294901760
        %2076 = vmatpush1.msra.mxu0 %v2075
        %2077 = vmatprep.subr.mxu0 0.0
        %v2078 = vand.u32 %v349, 4294901760
        %v2079 = vsub.f32 %v349, %v2078
        %v2080 = vand.u32 %v2079, 4294901760
        %v2081 = vsub.f32 %v2079, %v2080
        %v2082 = vand.u32 %v2081, 4294901760
        %2083 = vmatpush1.msra.mxu0 %v2082
        %2084 = vmatprep.subr.mxu0 0.0
        %v2085 = vand.u32 %v350, 4294901760
        %v2086 = vsub.f32 %v350, %v2085
        %v2087 = vand.u32 %v2086, 4294901760
        %v2088 = vsub.f32 %v2086, %v2087
        %v2089 = vand.u32 %v2088, 4294901760
        %2090 = vmatpush1.msra.mxu0 %v2089
        %2091 = vmatprep.subr.mxu0 0.0
        %2092 = vmatpush1.msra.mxu0 0.0
        %2093 = vmatprep.subr.mxu0 0.0
        %2094 = vmatpush1.msra.mxu0 0.0
        %2095 = vmatprep.subr.mxu0 0.0
        %2096 = vmatpush1.msra.mxu0 0.0
        %2097 = vmatprep.subr.mxu0 0.0
        %2098 = vmatpush1.msra.mxu0 0.0
        %2099 = vmatprep.subr.mxu0 0.0
        %2100 = vmatpush1.msra.mxu0 0.0
        %2101 = vmatprep.subr.mxu0 0.0
        %2102 = vmatpush1.msra.mxu0 0.0
        %2103 = vmatprep.subr.mxu0 0.0
        %2104 = vmatpush1.msra.mxu0 0.0
        %2105 = vmatprep.subr.mxu0 0.0
        %2106 = vmatpush1.msra.mxu0 0.0
        %2107 = vmatprep.subr.mxu0 0.0
        %2108 = vmatpush1.msra.mxu0 0.0
        %2109 = vmatprep.subr.mxu0 0.0
        %2110 = vmatpush1.msra.mxu0 0.0
        %2111 = vmatprep.subr.mxu0 0.0
        %2112 = vmatpush1.msra.mxu0 0.0
        %2113 = vmatprep.subr.mxu0 0.0
        %2114 = vmatpush1.msra.mxu0 0.0
        %2115 = vmatprep.subr.mxu0 0.0
        %2116 = vmatpush1.msra.mxu0 0.0
        %2117 = vmatprep.subr.mxu0 0.0
        %2118 = vmatpush1.msra.mxu0 0.0
        %2119 = vmatprep.subr.mxu0 0.0
        %2120 = vmatpush1.msra.mxu0 0.0
        %2121 = vmatprep.subr.mxu0 0.0
        %2122 = vmatpush1.msra.mxu0 0.0
        %2123 = vmatprep.mubr.f32.mxu0 0.0
        %v2124 = vand.u32 %v1887, 4294901760
        %2125 = vmatmul.mubr.f32.gmra.mrb[0].mxu0 %v2124
        %v2126 = vpop.f32.mrb[0].mxu0
        %v2127 = vadd.f32 %v1976, %v2126
        %v2128 = vpop.f32.mrb[0].mxu0
        %2129 = vdwg.mxu0
        %2130 = vmatprep.subr.mxu0 0.0
        %v2131 = vand.u32 %v335, 4294901760
        %v2132 = vsub.f32 %v335, %v2131
        %2133 = vmatpush1.msra.mxu0 %v2132
        %2134 = vmatprep.subr.mxu0 0.0
        %v2135 = vand.u32 %v336, 4294901760
        %v2136 = vsub.f32 %v336, %v2135
        %2137 = vmatpush1.msra.mxu0 %v2136
        %2138 = vmatprep.subr.mxu0 0.0
        %v2139 = vand.u32 %v337, 4294901760
        %v2140 = vsub.f32 %v337, %v2139
        %2141 = vmatpush1.msra.mxu0 %v2140
        %2142 = vmatprep.subr.mxu0 0.0
        %v2143 = vand.u32 %v338, 4294901760
        %v2144 = vsub.f32 %v338, %v2143
        %2145 = vmatpush1.msra.mxu0 %v2144
        %2146 = vmatprep.subr.mxu0 0.0
        %v2147 = vand.u32 %v339, 4294901760
        %v2148 = vsub.f32 %v339, %v2147
        %2149 = vmatpush1.msra.mxu0 %v2148
        %2150 = vmatprep.subr.mxu0 0.0
        %v2151 = vand.u32 %v340, 4294901760
        %v2152 = vsub.f32 %v340, %v2151
        %2153 = vmatpush1.msra.mxu0 %v2152
        %2154 = vmatprep.subr.mxu0 0.0
        %v2155 = vand.u32 %v341, 4294901760
        %v2156 = vsub.f32 %v341, %v2155
        %2157 = vmatpush1.msra.mxu0 %v2156
        %2158 = vmatprep.subr.mxu0 0.0
        %v2159 = vand.u32 %v342, 4294901760
        %v2160 = vsub.f32 %v342, %v2159
        %2161 = vmatpush1.msra.mxu0 %v2160
        %2162 = vmatprep.subr.mxu0 0.0
        %v2163 = vand.u32 %v343, 4294901760
        %v2164 = vsub.f32 %v343, %v2163
        %2165 = vmatpush1.msra.mxu0 %v2164
        %2166 = vmatprep.subr.mxu0 0.0
        %v2167 = vand.u32 %v344, 4294901760
        %v2168 = vsub.f32 %v344, %v2167
        %2169 = vmatpush1.msra.mxu0 %v2168
        %2170 = vmatprep.subr.mxu0 0.0
        %v2171 = vand.u32 %v345, 4294901760
        %v2172 = vsub.f32 %v345, %v2171
        %2173 = vmatpush1.msra.mxu0 %v2172
        %2174 = vmatprep.subr.mxu0 0.0
        %v2175 = vand.u32 %v346, 4294901760
        %v2176 = vsub.f32 %v346, %v2175
        %2177 = vmatpush1.msra.mxu0 %v2176
        %2178 = vmatprep.subr.mxu0 0.0
        %v2179 = vand.u32 %v347, 4294901760
        %v2180 = vsub.f32 %v347, %v2179
        %2181 = vmatpush1.msra.mxu0 %v2180
        %2182 = vmatprep.subr.mxu0 0.0
        %v2183 = vand.u32 %v348, 4294901760
        %v2184 = vsub.f32 %v348, %v2183
        %2185 = vmatpush1.msra.mxu0 %v2184
        %2186 = vmatprep.subr.mxu0 0.0
        %v2187 = vand.u32 %v349, 4294901760
        %v2188 = vsub.f32 %v349, %v2187
        %2189 = vmatpush1.msra.mxu0 %v2188
        %2190 = vmatprep.subr.mxu0 0.0
        %v2191 = vand.u32 %v350, 4294901760
        %v2192 = vsub.f32 %v350, %v2191
        %2193 = vmatpush1.msra.mxu0 %v2192
        %2194 = vmatprep.subr.mxu0 0.0
        %2195 = vmatpush1.msra.mxu0 0.0
        %2196 = vmatprep.subr.mxu0 0.0
        %2197 = vmatpush1.msra.mxu0 0.0
        %2198 = vmatprep.subr.mxu0 0.0
        %2199 = vmatpush1.msra.mxu0 0.0
        %2200 = vmatprep.subr.mxu0 0.0
        %2201 = vmatpush1.msra.mxu0 0.0
        %2202 = vmatprep.subr.mxu0 0.0
        %2203 = vmatpush1.msra.mxu0 0.0
        %2204 = vmatprep.subr.mxu0 0.0
        %2205 = vmatpush1.msra.mxu0 0.0
        %2206 = vmatprep.subr.mxu0 0.0
        %2207 = vmatpush1.msra.mxu0 0.0
        %2208 = vmatprep.subr.mxu0 0.0
        %2209 = vmatpush1.msra.mxu0 0.0
        %2210 = vmatprep.subr.mxu0 0.0
        %2211 = vmatpush1.msra.mxu0 0.0
        %2212 = vmatprep.subr.mxu0 0.0
        %2213 = vmatpush1.msra.mxu0 0.0
        %2214 = vmatprep.subr.mxu0 0.0
        %2215 = vmatpush1.msra.mxu0 0.0
        %2216 = vmatprep.subr.mxu0 0.0
        %2217 = vmatpush1.msra.mxu0 0.0
        %2218 = vmatprep.subr.mxu0 0.0
        %2219 = vmatpush1.msra.mxu0 0.0
        %2220 = vmatprep.subr.mxu0 0.0
        %2221 = vmatpush1.msra.mxu0 0.0
        %2222 = vmatprep.subr.mxu0 0.0
        %2223 = vmatpush1.msra.mxu0 0.0
        %2224 = vmatprep.subr.mxu0 0.0
        %2225 = vmatpush1.msra.mxu0 0.0
        %2226 = vmatprep.mubr.f32.mxu0 0.0
        %v2227 = vand.u32 %v1887, 4294901760
        %v2228 = vsub.f32 %v1887, %v2227
        %2229 = vmatmul.mubr.f32.gmra.mrb[0].mxu0 %v2228
        %v2230 = vpop.f32.mrb[0].mxu0
        %v2231 = vadd.f32 %v2127, %v2230
        %v2232 = vpop.f32.mrb[0].mxu0
        %2233 = vdwg.mxu0
        %2234 = vmatprep.subr.mxu0 0.0
        %v2235 = vand.u32 %v335, 4294901760
        %2236 = vmatpush1.msra.mxu0 %v2235
        %2237 = vmatprep.subr.mxu0 0.0
        %v2238 = vand.u32 %v336, 4294901760
        %2239 = vmatpush1.msra.mxu0 %v2238
        %2240 = vmatprep.subr.mxu0 0.0
        %v2241 = vand.u32 %v337, 4294901760
        %2242 = vmatpush1.msra.mxu0 %v2241
        %2243 = vmatprep.subr.mxu0 0.0
        %v2244 = vand.u32 %v338, 4294901760
        %2245 = vmatpush1.msra.mxu0 %v2244
        %2246 = vmatprep.subr.mxu0 0.0
        %v2247 = vand.u32 %v339, 4294901760
        %2248 = vmatpush1.msra.mxu0 %v2247
        %2249 = vmatprep.subr.mxu0 0.0
        %v2250 = vand.u32 %v340, 4294901760
        %2251 = vmatpush1.msra.mxu0 %v2250
        %2252 = vmatprep.subr.mxu0 0.0
        %v2253 = vand.u32 %v341, 4294901760
        %2254 = vmatpush1.msra.mxu0 %v2253
        %2255 = vmatprep.subr.mxu0 0.0
        %v2256 = vand.u32 %v342, 4294901760
        %2257 = vmatpush1.msra.mxu0 %v2256
        %2258 = vmatprep.subr.mxu0 0.0
        %v2259 = vand.u32 %v343, 4294901760
        %2260 = vmatpush1.msra.mxu0 %v2259
        %2261 = vmatprep.subr.mxu0 0.0
        %v2262 = vand.u32 %v344, 4294901760
        %2263 = vmatpush1.msra.mxu0 %v2262
        %2264 = vmatprep.subr.mxu0 0.0
        %v2265 = vand.u32 %v345, 4294901760
        %2266 = vmatpush1.msra.mxu0 %v2265
        %2267 = vmatprep.subr.mxu0 0.0
        %v2268 = vand.u32 %v346, 4294901760
        %2269 = vmatpush1.msra.mxu0 %v2268
        %2270 = vmatprep.subr.mxu0 0.0
        %v2271 = vand.u32 %v347, 4294901760
        %2272 = vmatpush1.msra.mxu0 %v2271
        %2273 = vmatprep.subr.mxu0 0.0
        %v2274 = vand.u32 %v348, 4294901760
        %2275 = vmatpush1.msra.mxu0 %v2274
        %2276 = vmatprep.subr.mxu0 0.0
        %v2277 = vand.u32 %v349, 4294901760
        %2278 = vmatpush1.msra.mxu0 %v2277
        %2279 = vmatprep.subr.mxu0 0.0
        %v2280 = vand.u32 %v350, 4294901760
        %2281 = vmatpush1.msra.mxu0 %v2280
        %2282 = vmatprep.subr.mxu0 0.0
        %2283 = vmatpush1.msra.mxu0 0.0
        %2284 = vmatprep.subr.mxu0 0.0
        %2285 = vmatpush1.msra.mxu0 0.0
        %2286 = vmatprep.subr.mxu0 0.0
        %2287 = vmatpush1.msra.mxu0 0.0
        %2288 = vmatprep.subr.mxu0 0.0
        %2289 = vmatpush1.msra.mxu0 0.0
        %2290 = vmatprep.subr.mxu0 0.0
        %2291 = vmatpush1.msra.mxu0 0.0
        %2292 = vmatprep.subr.mxu0 0.0
        %2293 = vmatpush1.msra.mxu0 0.0
        %2294 = vmatprep.subr.mxu0 0.0
        %2295 = vmatpush1.msra.mxu0 0.0
        %2296 = vmatprep.subr.mxu0 0.0
        %2297 = vmatpush1.msra.mxu0 0.0
        %2298 = vmatprep.subr.mxu0 0.0
        %2299 = vmatpush1.msra.mxu0 0.0
        %2300 = vmatprep.subr.mxu0 0.0
        %2301 = vmatpush1.msra.mxu0 0.0
        %2302 = vmatprep.subr.mxu0 0.0
        %2303 = vmatpush1.msra.mxu0 0.0
        %2304 = vmatprep.subr.mxu0 0.0
        %2305 = vmatpush1.msra.mxu0 0.0
        %2306 = vmatprep.subr.mxu0 0.0
        %2307 = vmatpush1.msra.mxu0 0.0
        %2308 = vmatprep.subr.mxu0 0.0
        %2309 = vmatpush1.msra.mxu0 0.0
        %2310 = vmatprep.subr.mxu0 0.0
        %2311 = vmatpush1.msra.mxu0 0.0
        %2312 = vmatprep.subr.mxu0 0.0
        %2313 = vmatpush1.msra.mxu0 0.0
        %2314 = vmatprep.mubr.f32.mxu0 0.0
        %v2315 = vand.u32 %v1887, 4294901760
        %v2316 = vsub.f32 %v1887, %v2315
        %v2317 = vand.u32 %v2316, 4294901760
        %2318 = vmatmul.mubr.f32.gmra.mrb[0].mxu0 %v2317
        %v2319 = vpop.f32.mrb[0].mxu0
        %v2320 = vadd.f32 %v2231, %v2319
        %v2321 = vpop.f32.mrb[0].mxu0
        %2322 = vdwg.mxu0
        %2323 = vmatprep.subr.mxu0 0.0
        %v2324 = vand.u32 %v335, 4294901760
        %v2325 = vsub.f32 %v335, %v2324
        %v2326 = vand.u32 %v2325, 4294901760
        %2327 = vmatpush1.msra.mxu0 %v2326
        %2328 = vmatprep.subr.mxu0 0.0
        %v2329 = vand.u32 %v336, 4294901760
        %v2330 = vsub.f32 %v336, %v2329
        %v2331 = vand.u32 %v2330, 4294901760
        %2332 = vmatpush1.msra.mxu0 %v2331
        %2333 = vmatprep.subr.mxu0 0.0
        %v2334 = vand.u32 %v337, 4294901760
        %v2335 = vsub.f32 %v337, %v2334
        %v2336 = vand.u32 %v2335, 4294901760
        %2337 = vmatpush1.msra.mxu0 %v2336
        %2338 = vmatprep.subr.mxu0 0.0
        %v2339 = vand.u32 %v338, 4294901760
        %v2340 = vsub.f32 %v338, %v2339
        %v2341 = vand.u32 %v2340, 4294901760
        %2342 = vmatpush1.msra.mxu0 %v2341
        %2343 = vmatprep.subr.mxu0 0.0
        %v2344 = vand.u32 %v339, 4294901760
        %v2345 = vsub.f32 %v339, %v2344
        %v2346 = vand.u32 %v2345, 4294901760
        %2347 = vmatpush1.msra.mxu0 %v2346
        %2348 = vmatprep.subr.mxu0 0.0
        %v2349 = vand.u32 %v340, 4294901760
        %v2350 = vsub.f32 %v340, %v2349
        %v2351 = vand.u32 %v2350, 4294901760
        %2352 = vmatpush1.msra.mxu0 %v2351
        %2353 = vmatprep.subr.mxu0 0.0
        %v2354 = vand.u32 %v341, 4294901760
        %v2355 = vsub.f32 %v341, %v2354
        %v2356 = vand.u32 %v2355, 4294901760
        %2357 = vmatpush1.msra.mxu0 %v2356
        %2358 = vmatprep.subr.mxu0 0.0
        %v2359 = vand.u32 %v342, 4294901760
        %v2360 = vsub.f32 %v342, %v2359
        %v2361 = vand.u32 %v2360, 4294901760
        %2362 = vmatpush1.msra.mxu0 %v2361
        %2363 = vmatprep.subr.mxu0 0.0
        %v2364 = vand.u32 %v343, 4294901760
        %v2365 = vsub.f32 %v343, %v2364
        %v2366 = vand.u32 %v2365, 4294901760
        %2367 = vmatpush1.msra.mxu0 %v2366
        %2368 = vmatprep.subr.mxu0 0.0
        %v2369 = vand.u32 %v344, 4294901760
        %v2370 = vsub.f32 %v344, %v2369
        %v2371 = vand.u32 %v2370, 4294901760
        %2372 = vmatpush1.msra.mxu0 %v2371
        %2373 = vmatprep.subr.mxu0 0.0
        %v2374 = vand.u32 %v345, 4294901760
        %v2375 = vsub.f32 %v345, %v2374
        %v2376 = vand.u32 %v2375, 4294901760
        %2377 = vmatpush1.msra.mxu0 %v2376
        %2378 = vmatprep.subr.mxu0 0.0
        %v2379 = vand.u32 %v346, 4294901760
        %v2380 = vsub.f32 %v346, %v2379
        %v2381 = vand.u32 %v2380, 4294901760
        %2382 = vmatpush1.msra.mxu0 %v2381
        %2383 = vmatprep.subr.mxu0 0.0
        %v2384 = vand.u32 %v347, 4294901760
        %v2385 = vsub.f32 %v347, %v2384
        %v2386 = vand.u32 %v2385, 4294901760
        %2387 = vmatpush1.msra.mxu0 %v2386
        %2388 = vmatprep.subr.mxu0 0.0
        %v2389 = vand.u32 %v348, 4294901760
        %v2390 = vsub.f32 %v348, %v2389
        %v2391 = vand.u32 %v2390, 4294901760
        %2392 = vmatpush1.msra.mxu0 %v2391
        %2393 = vmatprep.subr.mxu0 0.0
        %v2394 = vand.u32 %v349, 4294901760
        %v2395 = vsub.f32 %v349, %v2394
        %v2396 = vand.u32 %v2395, 4294901760
        %2397 = vmatpush1.msra.mxu0 %v2396
        %2398 = vmatprep.subr.mxu0 0.0
        %v2399 = vand.u32 %v350, 4294901760
        %v2400 = vsub.f32 %v350, %v2399
        %v2401 = vand.u32 %v2400, 4294901760
        %2402 = vmatpush1.msra.mxu0 %v2401
        %2403 = vmatprep.subr.mxu0 0.0
        %2404 = vmatpush1.msra.mxu0 0.0
        %2405 = vmatprep.subr.mxu0 0.0
        %2406 = vmatpush1.msra.mxu0 0.0
        %2407 = vmatprep.subr.mxu0 0.0
        %2408 = vmatpush1.msra.mxu0 0.0
        %2409 = vmatprep.subr.mxu0 0.0
        %2410 = vmatpush1.msra.mxu0 0.0
        %2411 = vmatprep.subr.mxu0 0.0
        %2412 = vmatpush1.msra.mxu0 0.0
        %2413 = vmatprep.subr.mxu0 0.0
        %2414 = vmatpush1.msra.mxu0 0.0
        %2415 = vmatprep.subr.mxu0 0.0
        %2416 = vmatpush1.msra.mxu0 0.0
        %2417 = vmatprep.subr.mxu0 0.0
        %2418 = vmatpush1.msra.mxu0 0.0
        %2419 = vmatprep.subr.mxu0 0.0
        %2420 = vmatpush1.msra.mxu0 0.0
        %2421 = vmatprep.subr.mxu0 0.0
        %2422 = vmatpush1.msra.mxu0 0.0
        %2423 = vmatprep.subr.mxu0 0.0
        %2424 = vmatpush1.msra.mxu0 0.0
        %2425 = vmatprep.subr.mxu0 0.0
        %2426 = vmatpush1.msra.mxu0 0.0
        %2427 = vmatprep.subr.mxu0 0.0
        %2428 = vmatpush1.msra.mxu0 0.0
        %2429 = vmatprep.subr.mxu0 0.0
        %2430 = vmatpush1.msra.mxu0 0.0
        %2431 = vmatprep.subr.mxu0 0.0
        %2432 = vmatpush1.msra.mxu0 0.0
        %2433 = vmatprep.subr.mxu0 0.0
        %2434 = vmatpush1.msra.mxu0 0.0
        %2435 = vmatprep.mubr.f32.mxu0 0.0
        %v2436 = vand.u32 %v1887, 4294901760
        %2437 = vmatmul.mubr.f32.gmra.mrb[0].mxu0 %v2436
        %v2438 = vpop.f32.mrb[0].mxu0
        %v2439 = vadd.f32 %v2320, %v2438
        %v2440 = vpop.f32.mrb[0].mxu0
        %2441 = vdwg.mxu0
        %2442 = vmatprep.subr.mxu0 0.0
        %v2443 = vand.u32 %v335, 4294901760
        %2444 = vmatpush1.msra.mxu0 %v2443
        %2445 = vmatprep.subr.mxu0 0.0
        %v2446 = vand.u32 %v336, 4294901760
        %2447 = vmatpush1.msra.mxu0 %v2446
        %2448 = vmatprep.subr.mxu0 0.0
        %v2449 = vand.u32 %v337, 4294901760
        %2450 = vmatpush1.msra.mxu0 %v2449
        %2451 = vmatprep.subr.mxu0 0.0
        %v2452 = vand.u32 %v338, 4294901760
        %2453 = vmatpush1.msra.mxu0 %v2452
        %2454 = vmatprep.subr.mxu0 0.0
        %v2455 = vand.u32 %v339, 4294901760
        %2456 = vmatpush1.msra.mxu0 %v2455
        %2457 = vmatprep.subr.mxu0 0.0
        %v2458 = vand.u32 %v340, 4294901760
        %2459 = vmatpush1.msra.mxu0 %v2458
        %2460 = vmatprep.subr.mxu0 0.0
        %v2461 = vand.u32 %v341, 4294901760
        %2462 = vmatpush1.msra.mxu0 %v2461
        %2463 = vmatprep.subr.mxu0 0.0
        %v2464 = vand.u32 %v342, 4294901760
        %2465 = vmatpush1.msra.mxu0 %v2464
        %2466 = vmatprep.subr.mxu0 0.0
        %v2467 = vand.u32 %v343, 4294901760
        %2468 = vmatpush1.msra.mxu0 %v2467
        %2469 = vmatprep.subr.mxu0 0.0
        %v2470 = vand.u32 %v344, 4294901760
        %2471 = vmatpush1.msra.mxu0 %v2470
        %2472 = vmatprep.subr.mxu0 0.0
        %v2473 = vand.u32 %v345, 4294901760
        %2474 = vmatpush1.msra.mxu0 %v2473
        %2475 = vmatprep.subr.mxu0 0.0
        %v2476 = vand.u32 %v346, 4294901760
        %2477 = vmatpush1.msra.mxu0 %v2476
        %2478 = vmatprep.subr.mxu0 0.0
        %v2479 = vand.u32 %v347, 4294901760
        %2480 = vmatpush1.msra.mxu0 %v2479
        %2481 = vmatprep.subr.mxu0 0.0
        %v2482 = vand.u32 %v348, 4294901760
        %2483 = vmatpush1.msra.mxu0 %v2482
        %2484 = vmatprep.subr.mxu0 0.0
        %v2485 = vand.u32 %v349, 4294901760
        %2486 = vmatpush1.msra.mxu0 %v2485
        %2487 = vmatprep.subr.mxu0 0.0
        %v2488 = vand.u32 %v350, 4294901760
        %2489 = vmatpush1.msra.mxu0 %v2488
        %2490 = vmatprep.subr.mxu0 0.0
        %2491 = vmatpush1.msra.mxu0 0.0
        %2492 = vmatprep.subr.mxu0 0.0
        %2493 = vmatpush1.msra.mxu0 0.0
        %2494 = vmatprep.subr.mxu0 0.0
        %2495 = vmatpush1.msra.mxu0 0.0
        %2496 = vmatprep.subr.mxu0 0.0
        %2497 = vmatpush1.msra.mxu0 0.0
        %2498 = vmatprep.subr.mxu0 0.0
        %2499 = vmatpush1.msra.mxu0 0.0
        %2500 = vmatprep.subr.mxu0 0.0
        %2501 = vmatpush1.msra.mxu0 0.0
        %2502 = vmatprep.subr.mxu0 0.0
        %2503 = vmatpush1.msra.mxu0 0.0
        %2504 = vmatprep.subr.mxu0 0.0
        %2505 = vmatpush1.msra.mxu0 0.0
        %2506 = vmatprep.subr.mxu0 0.0
        %2507 = vmatpush1.msra.mxu0 0.0
        %2508 = vmatprep.subr.mxu0 0.0
        %2509 = vmatpush1.msra.mxu0 0.0
        %2510 = vmatprep.subr.mxu0 0.0
        %2511 = vmatpush1.msra.mxu0 0.0
        %2512 = vmatprep.subr.mxu0 0.0
        %2513 = vmatpush1.msra.mxu0 0.0
        %2514 = vmatprep.subr.mxu0 0.0
        %2515 = vmatpush1.msra.mxu0 0.0
        %2516 = vmatprep.subr.mxu0 0.0
        %2517 = vmatpush1.msra.mxu0 0.0
        %2518 = vmatprep.subr.mxu0 0.0
        %2519 = vmatpush1.msra.mxu0 0.0
        %2520 = vmatprep.subr.mxu0 0.0
        %2521 = vmatpush1.msra.mxu0 0.0
        %2522 = vmatprep.mubr.f32.mxu0 0.0
        %v2523 = vand.u32 %v1887, 4294901760
        %2524 = vmatmul.mubr.f32.gmra.mrb[0].mxu0 %v2523
        %v2525 = vpop.f32.mrb[0].mxu0
        %v2526 = vadd.f32 %v2439, %v2525
        %v2527 = vpop.f32.mrb[0].mxu0
        %2528 = vdwg.mxu0
        %vm2529 = vcmp.lt.s32.totalorder %v281, 18
        %v2530 = vsel %vm2529, 1, 0
        %vm2531 = vcmp.eq.s32.totalorder %v2530, 1
        %v2532 = vsel %vm2531, %v2526, 0.0
        %v2533 = vadd.f32 %v1165, %v2532
        %v2534 = vadd.f32 %v1168, %v2526
        %v2535 = vadd.f32 %v2533, %v2534
        %s2536 = smul.f32 %s277, 0.041666668
        %v2537 = vstv %s2536
        %v2538 = vmul.f32 %v2535, %v2537
        %s2539 = scalar_lea.vmem %s266, 72 [#allocation9]
        %2540 = vst.msk [vmem:[%s2539] sm:$0xff] %vm284, %v2538
        %s2541 = sand.u32 %s139, 1
        %s2542 = scalar_lea.sflag [#allocation4], %s2541
        %s2543 = sand.u32 %s139, 1
        %s2544 = smul.addr %s2543, 104
        %s2545 = scalar_lea.vmem [#allocation9], %s2544
        // Predicated region
        $region49: #{tpu_custom_call.1} parent=35 // pred_check
          %p2546 = pneg %p149
        $region50: #{tpu_custom_call.1} parent=35 // pred_check_branch
          %2548 = sbr.rel (%p2546) target = $region52
        $region51: #{tpu_custom_call.1} parent=35 // pred_region
          %s2550 = ssub.s32 1664, 1664
          %2551 = vsyncadd %s2542, %s2550
          %s2552 = sadd.s32 %s28, %s27
          %s2553 = smul.addr %s2552, 128
          %s2554 = scalar_lea.hbm %s4, %s2553
          %s2555 = sshll.u32 %s2545, 4
          %s2556 = int_to_ptr.vmem [resolvable:$true] %s2555
          %2561 = dma.vmem_to_hbm [thread:$0]  %s2556, 1664, %s2554, %s2542, 128, 512, 8
        $region52: #{tpu_custom_call.1} parent=35 // pred_fallthru
          _
      $region36: #{tpu_custom_call.1} parent=5 // pred_fallthru
        _
      %p2562 = scmp.le.s32.totalorder 2, %s18
      // Predicated region
      $region53: #{tpu_custom_call.1} parent=5 // pred_check
        %p2563 = pneg %p2562
      $region54: #{tpu_custom_call.1} parent=5 // pred_check_branch
        %2565 = sbr.rel (%p2563) target = $region56
      $region55: #{tpu_custom_call.1} parent=5 // pred_region
        %s2566 = ssub.s32 %s18, 2
        // Predicated region
        $region57: #{tpu_custom_call.1} parent=55 // pred_check
          %p2567 = pneg %p155
        $region58: #{tpu_custom_call.1} parent=55 // pred_check_branch
          %2569 = sbr.rel (%p2567) target = $region60
        $region59: #{tpu_custom_call.1} parent=55 // pred_region
          %s2570 = sand.u32 %s140, 1
          %s2571 = scalar_lea.sflag [#allocation4], %s2570
          %s2572 = sand.u32 %s140, 1
          %s2573 = smul.addr %s2572, 104
          %s2574 = scalar_lea.vmem [#allocation9], %s2573
          %2575 = dma.done %s2571, 1664
        $region60: #{tpu_custom_call.1} parent=55 // pred_fallthru
          _
      $region56: #{tpu_custom_call.1} parent=5 // pred_fallthru
        _
    $region6: #{tpu_custom_call.1} parent=1 // loop_footer
      %s22 = sadd.s32 1, %s18
    $region7: #{tpu_custom_call.1} parent=1 // loop_footer_branch
      %17 = sbr.rel target = $region3
    $region8: #{tpu_custom_call.1} parent=1 // loop_exit
      _
    %2576 = vsyncpa [#allocation3], 1
    %s2577 = scalar_lea.sflag [#allocation3], 1
    %2578 = vsyncpa %s2577, 1
    %2579 = vsyncpa [#allocation4], 1
    %s2580 = scalar_lea.sflag [#allocation4], 1
    %2581 = vsyncpa %s2580, 1
    %2582 = vsyncpa [#allocation5], 1
    %s2583 = scalar_lea.sflag [#allocation5], 1
    %2584 = vsyncpa %s2583, 1
    %2585 = vsyncpa [#allocation7], 1

</llo_original>
